<compile_context>
chip_gen: v5e
topology: v5e:2x2
jax: 0.10.0
libtpu: 0.0.40
codegen_flags: <defaults>
</compile_context>

<pallas_src>
import functools

import jax
import jax.numpy as jnp
from jax import lax
from jax.experimental import pallas as pl
from jax.experimental.pallas import tpu as pltpu


# ----------------------------- Pallas kernels ------------------------------ #

def _h2_tile(x_ref, w1_ref, b1_ref, w2_ref, slope):
    """Fused conv1(+bias)+LeakyReLU (VPU) -> conv2 (MXU) on one (cin, TM) tile.

    Transposed layout: channels on sublanes, pixels on the 128-lane axis.
      x_ref : (cin, TM)   input pixels (f32 or bf16; consumed in native NCHW order)
      w1_ref: (c1, cin)   f32
      b1_ref: (c1, 1)     f32
      w2_ref: (c2, c1)    compute dtype (bf16 by default)
    Returns h2 of shape (c2, TM) in f32.
    """
    x = x_ref[...].astype(jnp.float32)              # (cin, TM)
    w1 = w1_ref[...]                                # (c1, cin)
    cin = x.shape[0]
    h1 = b1_ref[...]                                # (c1, 1) -> broadcasts
    for k in range(cin):                            # cin is 3-4: VPU outer-product MACs
        h1 = h1 + w1[:, k:k + 1] * x[k:k + 1, :]    # (c1,1)*(1,TM) -> (c1,TM)
    h1 = jnp.where(h1 >= 0, h1, slope * h1)         # LeakyReLU(0.2)
    h2 = jnp.dot(w2_ref[...], h1.astype(w2_ref.dtype),
                 preferred_element_type=jnp.float32)   # (c2, TM) on the MXU
    return h2


def _stats_kernel(x_ref, w1_ref, b1_ref, w2_ref, sum_ref, sq_ref, *, slope):
    """Pass 1: per-batch, per-channel sum / sum-of-squares of h2 (f32 accumulators)."""
    @pl.when(pl.program_id(1) == 0)
    def _init():
        sum_ref[...] = jnp.zeros_like(sum_ref)
        sq_ref[...] = jnp.zeros_like(sq_ref)

    h2 = _h2_tile(x_ref, w1_ref, b1_ref, w2_ref, slope)
    sum_ref[...] += jnp.sum(h2, axis=1, keepdims=True)      # (c2, 1)
    sq_ref[...] += jnp.sum(h2 * h2, axis=1, keepdims=True)  # (c2, 1)


def _apply_kernel(x_ref, w1_ref, b1_ref, w2_ref, scale_ref, shift_ref, w3_ref,
                  out_ref, *, slope, use_sigmoid):
    """Pass 2: recompute h2, apply folded BN + LeakyReLU + final 1x1 conv.

    The final conv contracts the channel axis on the MXU ((8,c2)x(c2,TM)); only
    row 0 of the result is real and only that (1, TM) lane-dense row is stored.
    """
    h2 = _h2_tile(x_ref, w1_ref, b1_ref, w2_ref, slope)
    y = h2 * scale_ref[...] + shift_ref[...]        # folded BatchNorm, f32
    y = jnp.where(y >= 0, y, slope * y)
    out8 = jnp.dot(w3_ref[...], y.astype(w3_ref.dtype),
                   preferred_element_type=jnp.float32)   # (8, TM), row 0 is real
    row = out8[0:1, :]                              # (1, TM): no 8x write amp
    if use_sigmoid:
        row = jax.nn.sigmoid(row)
    out_ref[...] = row.astype(out_ref.dtype)


# ------------------------------- wrappers ----------------------------------- #

def _pick_block_m(m_hw, block_m):
    if block_m is None:
        for cand in (2048, 1024, 512, 256, 128):
            if m_hw % cand == 0:
                return cand
        return m_hw  # TODO(synk): masked tail tile for ragged H*W
    assert m_hw % block_m == 0 and (block_m % 128 == 0 or block_m == m_hw), (m_hw, block_m)
    return block_m


def pixel_discriminator_forward(x, params, *, block_m=None, use_sigmoid=False,
                                compute_dtype=jnp.bfloat16, eps=1e-5, slope=0.2):
    """x: (N, C_in, H, W) NCHW (PyTorch convention). Returns (N, 1, H, W) float32."""
    w1, b1, w2 = params["w1"], params["b1"], params["w2"]
    gamma, beta, w3 = params["bn_gamma"], params["bn_beta"], params["w3"]

    n, cin, h, w = x.shape
    c1 = w1.shape[0]        # ndf
    c2 = w2.shape[0]        # 2 * ndf  (128 for the default ndf=64 -> lane-dense)
    m_hw = h * w
    m_total = n * m_hw

    # Free reshape only (no transpose): x stays in native NCHW memory order.
    x3 = x.reshape(n, cin, m_hw)

    # conv1 runs on the VPU in f32 (tiny weights); conv2/conv3 operands in compute dtype.
    w1m = w1.reshape(c1, cin).astype(jnp.float32)                 # (c1, cin)
    b1m = b1.reshape(c1, 1).astype(jnp.float32)                   # (c1, 1)
    w2m = w2.reshape(c2, c1).astype(compute_dtype)                # (c2, c1)
    w3m = jnp.zeros((8, c2), compute_dtype).at[0, :].set(
        w3.reshape(c2).astype(compute_dtype))                     # (8, c2), row 0 real

    tm = _pick_block_m(m_hw, block_m)
    n_blk = m_hw // tm

    def full(shape):
        return pl.BlockSpec(shape, lambda i, j: (0,) * len(shape))

    x_spec = pl.BlockSpec((None, cin, tm), lambda i, j: (i, 0, j))
    acc_spec = pl.BlockSpec((None, c2, 1), lambda i, j: (i, 0, 0))

    # ---- Pass 1: per-batch partial sum / sum-sq of h2 (batch axis parallel) ----
    sums, sqs = pl.pallas_call(
        functools.partial(_stats_kernel, slope=slope),
        out_shape=(jax.ShapeDtypeStruct((n, c2, 1), jnp.float32),
                   jax.ShapeDtypeStruct((n, c2, 1), jnp.float32)),
        grid_spec=pltpu.PrefetchScalarGridSpec(
            num_scalar_prefetch=0,
            grid=(n, n_blk),
            in_specs=[x_spec,
                      full((c1, cin)),
                      full((c1, 1)),
                      full((c2, c1))],
            out_specs=(acc_spec, acc_spec)),
        compiler_params=pltpu.CompilerParams(
            dimension_semantics=("parallel", "arbitrary")),
    )(x3, w1m, b1m, w2m)

    # ---- Fold BN stats into per-channel scale/shift (tiny f32 XLA op) ----
    mean = jnp.sum(sums, axis=0) / m_total                       # (c2, 1)
    var = jnp.maximum(jnp.sum(sqs, axis=0) / m_total - mean * mean, 0.0)
    scale = gamma.reshape(c2, 1).astype(jnp.float32) * lax.rsqrt(var + eps)
    shift = beta.reshape(c2, 1).astype(jnp.float32) - mean * scale

    # ---- Pass 2: recompute h2, BN + LeakyReLU + final conv, (1, TM) store ----
    out = pl.pallas_call(
        functools.partial(_apply_kernel, slope=slope, use_sigmoid=use_sigmoid),
        out_shape=jax.ShapeDtypeStruct((n, 1, m_hw), jnp.float32),
        grid_spec=pltpu.PrefetchScalarGridSpec(
            num_scalar_prefetch=0,
            grid=(n, n_blk),
            in_specs=[x_spec,
                      full((c1, cin)),
                      full((c1, 1)),
                      full((c2, c1)),
                      full((c2, 1)),
                      full((c2, 1)),
                      full((8, c2))],
            out_specs=pl.BlockSpec((None, 1, tm), lambda i, j: (i, 0, j))),
        compiler_params=pltpu.CompilerParams(
            dimension_semantics=("parallel", "parallel")),
    )(x3, w1m, b1m, w2m, scale, shift, w3m)

    return out.reshape(n, 1, h, w)


# ----------------------- pure-JAX reference (cross-check) ------------------- #

def reference_forward(x, params, *, use_sigmoid=False, eps=1e-5, slope=0.2):
    dn = ("NCHW", "OIHW", "NCHW")
    hp = lax.Precision.HIGHEST
    y = lax.conv_general_dilated(x, params["w1"], (1, 1), "VALID",
                                 dimension_numbers=dn, precision=hp)
    y = y + params["b1"].reshape(1, -1, 1, 1)
    y = jnp.where(y >= 0, y, slope * y)
    z = lax.conv_general_dilated(y, params["w2"], (1, 1), "VALID",
                                 dimension_numbers=dn, precision=hp)
    mean = z.mean(axis=(0, 2, 3), keepdims=True)
    var = ((z - mean) ** 2).mean(axis=(0, 2, 3), keepdims=True)
    z = (z - mean) * lax.rsqrt(var + eps)
    z = z * params["bn_gamma"].reshape(1, -1, 1, 1) + params["bn_beta"].reshape(1, -1, 1, 1)
    z = jnp.where(z >= 0, z, slope * z)
    out = lax.conv_general_dilated(z, params["w3"], (1, 1), "VALID",
                                   dimension_numbers=dn, precision=hp)
    if use_sigmoid:
        out = jax.nn.sigmoid(out)
    return out


if __name__ == "__main__":
    N, C_IN, H, W = 2, 4, 16, 16
    NDF = 64                                 # module default -> 2*NDF = 128 lanes

    key = jax.random.PRNGKey(0)
    k1, k2, k3, k4, k5, k6, k7 = jax.random.split(key, 7)
    x = jax.random.normal(k1, (N, C_IN, H, W), jnp.float32)
    params = {
        # init_weights('normal', 0.02)-style synthetic weights
        "w1": 0.02 * jax.random.normal(k2, (NDF, C_IN, 1, 1), jnp.float32),
        "b1": 0.02 * jax.random.normal(k3, (NDF,), jnp.float32),
        "w2": 0.02 * jax.random.normal(k4, (2 * NDF, NDF, 1, 1), jnp.float32),
        "bn_gamma": 1.0 + 0.1 * jax.random.normal(k5, (2 * NDF,), jnp.float32),
        "bn_beta": 0.05 * jax.random.normal(k6, (2 * NDF,), jnp.float32),
        "w3": 0.02 * jax.random.normal(k7, (1, 2 * NDF, 1, 1), jnp.float32),
    }

    ref = reference_forward(x, params)

    # Fast path (default bf16 MXU operands) — dtype-aware tolerance.
    fwd_bf16 = jax.jit(pixel_discriminator_forward)
    out_bf16 = jax.block_until_ready(fwd_bf16(x, params))
    assert out_bf16.shape == (N, 1, H, W), out_bf16.shape
    err_bf16 = float(jnp.max(jnp.abs(out_bf16 - ref)))
    assert jnp.allclose(out_bf16, ref, atol=5e-2, rtol=5e-2), err_bf16

    # Strict parity path (f32 compute) — tight tolerance against the f32 reference.
    fwd_f32 = jax.jit(functools.partial(pixel_discriminator_forward,
                                        compute_dtype=jnp.float32))
    out_f32 = jax.block_until_ready(fwd_f32(x, params))
    err_f32 = float(jnp.max(jnp.abs(out_f32 - ref)))
    assert jnp.allclose(out_f32, ref, atol=2e-4, rtol=2e-4), err_f32

    print("KERNEL_OK")
</pallas_src>

<mosaic_0001>
module attributes {stable_mosaic.version = 11 : i64} {
  func.func @_stats_kernel(%arg0: i32, %arg1: i32, %arg2: memref<1x4x256xf32, #tpu.memory_space<vmem>>, %arg3: memref<64x4xf32, #tpu.memory_space<vmem>>, %arg4: memref<64x1xf32, #tpu.memory_space<vmem>>, %arg5: memref<128x64xbf16, #tpu.memory_space<vmem>>, %arg6: memref<1x128x1xf32, #tpu.memory_space<vmem>>, %arg7: memref<1x128x1xf32, #tpu.memory_space<vmem>>) attributes {dimension_semantics = [#tpu.dimension_semantics<parallel>, #tpu.dimension_semantics<arbitrary>], iteration_bounds = array<i64: 2, 1>, scalar_prefetch = 0 : i64, scratch_operands = 0 : i64, tpu.core_type = #tpu.core_type<tc>, window_params = [{transform_indices = @transform_0, window_bounds = array<i64: 1, 4, 256>}, {pipeline_mode = #tpu.pipeline_mode<synchronous>, transform_indices = @transform_1, window_bounds = array<i64: 64, 4>}, {pipeline_mode = #tpu.pipeline_mode<synchronous>, transform_indices = @transform_2, window_bounds = array<i64: 64, 1>}, {pipeline_mode = #tpu.pipeline_mode<synchronous>, transform_indices = @transform_3, window_bounds = array<i64: 128, 64>}, {transform_indices = @transform_4, window_bounds = array<i64: 1, 128, 1>}, {transform_indices = @transform_5, window_bounds = array<i64: 1, 128, 1>}]} {
    %c0_i32 = arith.constant 0 : i32
    %0 = arith.cmpi eq, %arg1, %c0_i32 : i32
    %1 = arith.extui %0 : i1 to i32
    %c0_i32_0 = arith.constant 0 : i32
    %2 = arith.cmpi ne, %1, %c0_i32_0 : i32
    scf.if %2 {
      %cst_25 = arith.constant 0.000000e+00 : f32
      %57 = vector.broadcast %cst_25 : f32 to vector<128x1xf32>
      %c0_26 = arith.constant 0 : index
      %c0_27 = arith.constant 0 : index
      %c0_28 = arith.constant 0 : index
      %58 = vector.load %arg6[%c0_26, %c0_27, %c0_28] : memref<1x128x1xf32, #tpu.memory_space<vmem>>, vector<1x128x1xf32>
      %59 = vector.shape_cast %58 : vector<1x128x1xf32> to vector<128x1xf32>
      %60 = vector.shape_cast %57 : vector<128x1xf32> to vector<1x128x1xf32>
      tpu.vector_store %arg6[%c0_26, %c0_27, %c0_28], %60 {strides = array<i32>} : memref<1x128x1xf32, #tpu.memory_space<vmem>>, vector<1x128x1xf32>,
      %cst_29 = arith.constant 0.000000e+00 : f32
      %61 = vector.broadcast %cst_29 : f32 to vector<128x1xf32>
      %c0_30 = arith.constant 0 : index
      %c0_31 = arith.constant 0 : index
      %c0_32 = arith.constant 0 : index
      %62 = vector.load %arg7[%c0_30, %c0_31, %c0_32] : memref<1x128x1xf32, #tpu.memory_space<vmem>>, vector<1x128x1xf32>
      %63 = vector.shape_cast %62 : vector<1x128x1xf32> to vector<128x1xf32>
      %64 = vector.shape_cast %61 : vector<128x1xf32> to vector<1x128x1xf32>
      tpu.vector_store %arg7[%c0_30, %c0_31, %c0_32], %64 {strides = array<i32>} : memref<1x128x1xf32, #tpu.memory_space<vmem>>, vector<1x128x1xf32>,
    } else {
    }
    %c0 = arith.constant 0 : index
    %c0_1 = arith.constant 0 : index
    %c0_2 = arith.constant 0 : index
    %3 = vector.load %arg2[%c0, %c0_1, %c0_2] : memref<1x4x256xf32, #tpu.memory_space<vmem>>, vector<1x4x256xf32>
    %4 = vector.shape_cast %3 : vector<1x4x256xf32> to vector<4x256xf32>
    %c0_3 = arith.constant 0 : index
    %c0_4 = arith.constant 0 : index
    %5 = vector.load %arg3[%c0_3, %c0_4] : memref<64x4xf32, #tpu.memory_space<vmem>>, vector<64x4xf32>
    %c0_5 = arith.constant 0 : index
    %c0_6 = arith.constant 0 : index
    %6 = vector.load %arg4[%c0_5, %c0_6] : memref<64x1xf32, #tpu.memory_space<vmem>>, vector<64x1xf32>
    %7 = vector.extract_strided_slice %5 {offsets = [0, 0], sizes = [64, 1], strides = [1, 1]} : vector<64x4xf32> to vector<64x1xf32>
    %8 = vector.extract_strided_slice %4 {offsets = [0, 0], sizes = [1, 256], strides = [1, 1]} : vector<4x256xf32> to vector<1x256xf32>
    %9 = vector.broadcast %7 : vector<64x1xf32> to vector<64x256xf32>
    %10 = vector.broadcast %8 : vector<1x256xf32> to vector<64x256xf32>
    %11 = arith.mulf %9, %10 : vector<64x256xf32>
    %12 = vector.broadcast %6 : vector<64x1xf32> to vector<64x256xf32>
    %13 = arith.addf %12, %11 : vector<64x256xf32>
    %14 = vector.extract_strided_slice %5 {offsets = [0, 1], sizes = [64, 1], strides = [1, 1]} : vector<64x4xf32> to vector<64x1xf32>
    %15 = vector.extract_strided_slice %4 {offsets = [1, 0], sizes = [1, 256], strides = [1, 1]} : vector<4x256xf32> to vector<1x256xf32>
    %16 = vector.broadcast %14 : vector<64x1xf32> to vector<64x256xf32>
    %17 = vector.broadcast %15 : vector<1x256xf32> to vector<64x256xf32>
    %18 = arith.mulf %16, %17 : vector<64x256xf32>
    %19 = arith.addf %13, %18 : vector<64x256xf32>
    %20 = vector.extract_strided_slice %5 {offsets = [0, 2], sizes = [64, 1], strides = [1, 1]} : vector<64x4xf32> to vector<64x1xf32>
    %21 = vector.extract_strided_slice %4 {offsets = [2, 0], sizes = [1, 256], strides = [1, 1]} : vector<4x256xf32> to vector<1x256xf32>
    %22 = vector.broadcast %20 : vector<64x1xf32> to vector<64x256xf32>
    %23 = vector.broadcast %21 : vector<1x256xf32> to vector<64x256xf32>
    %24 = arith.mulf %22, %23 : vector<64x256xf32>
    %25 = arith.addf %19, %24 : vector<64x256xf32>
    %26 = vector.extract_strided_slice %5 {offsets = [0, 3], sizes = [64, 1], strides = [1, 1]} : vector<64x4xf32> to vector<64x1xf32>
    %27 = vector.extract_strided_slice %4 {offsets = [3, 0], sizes = [1, 256], strides = [1, 1]} : vector<4x256xf32> to vector<1x256xf32>
    %28 = vector.broadcast %26 : vector<64x1xf32> to vector<64x256xf32>
    %29 = vector.broadcast %27 : vector<1x256xf32> to vector<64x256xf32>
    %30 = arith.mulf %28, %29 : vector<64x256xf32>
    %31 = arith.addf %25, %30 : vector<64x256xf32>
    %cst = arith.constant 0.000000e+00 : f32
    %32 = vector.broadcast %cst : f32 to vector<64x256xf32>
    %33 = arith.cmpf oge, %31, %32 : vector<64x256xf32>
    %cst_7 = arith.constant 2.000000e-01 : f32
    %34 = vector.broadcast %cst_7 : f32 to vector<64x256xf32>
    %35 = arith.mulf %34, %31 : vector<64x256xf32>
    %36 = arith.select %33, %31, %35 : vector<64x256xi1>, vector<64x256xf32>
    %c0_8 = arith.constant 0 : index
    %c0_9 = arith.constant 0 : index
    %37 = vector.load %arg5[%c0_8, %c0_9] : memref<128x64xbf16, #tpu.memory_space<vmem>>, vector<128x64xbf16>
    %38 = arith.truncf %36 : vector<64x256xf32> to vector<64x256xbf16>
    %cst_10 = arith.constant dense<0.000000e+00> : vector<128x256xf32>
    %39 = tpu.matmul %37, %38, %cst_10 {dimension_numbers = #tpu.dot_dimension_numbers<[1], [0], [0], [1], [0, 0, 1, 1], [], []>} : vector<128x64xbf16>, vector<64x256xbf16>, vector<128x256xf32> -> vector<128x256xf32>
    %c0_11 = arith.constant 0 : index
    %c0_12 = arith.constant 0 : index
    %c0_13 = arith.constant 0 : index
    %40 = vector.load %arg6[%c0_11, %c0_12, %c0_13] : memref<1x128x1xf32, #tpu.memory_space<vmem>>, vector<1x128x1xf32>
    %41 = vector.shape_cast %40 : vector<1x128x1xf32> to vector<128x1xf32>
    %cst_14 = arith.constant dense<0.000000e+00> : vector<128xf32>
    %42 = vector.multi_reduction <add>, %39, %cst_14 [1] : vector<128x256xf32> to vector<128xf32>
    %43 = vector.shape_cast %42 : vector<128xf32> to vector<128x1xf32>
    %44 = arith.addf %41, %43 : vector<128x1xf32>
    %c0_15 = arith.constant 0 : index
    %c0_16 = arith.constant 0 : index
    %c0_17 = arith.constant 0 : index
    %45 = vector.load %arg6[%c0_15, %c0_16, %c0_17] : memref<1x128x1xf32, #tpu.memory_space<vmem>>, vector<1x128x1xf32>
    %46 = vector.shape_cast %45 : vector<1x128x1xf32> to vector<128x1xf32>
    %47 = vector.shape_cast %44 : vector<128x1xf32> to vector<1x128x1xf32>
    tpu.vector_store %arg6[%c0_15, %c0_16, %c0_17], %47 {strides = array<i32>} : memref<1x128x1xf32, #tpu.memory_space<vmem>>, vector<1x128x1xf32>,
    %c0_18 = arith.constant 0 : index
    %c0_19 = arith.constant 0 : index
    %c0_20 = arith.constant 0 : index
    %48 = vector.load %arg7[%c0_18, %c0_19, %c0_20] : memref<1x128x1xf32, #tpu.memory_space<vmem>>, vector<1x128x1xf32>
    %49 = vector.shape_cast %48 : vector<1x128x1xf32> to vector<128x1xf32>
    %50 = arith.mulf %39, %39 : vector<128x256xf32>
    %cst_21 = arith.constant dense<0.000000e+00> : vector<128xf32>
    %51 = vector.multi_reduction <add>, %50, %cst_21 [1] : vector<128x256xf32> to vector<128xf32>
    %52 = vector.shape_cast %51 : vector<128xf32> to vector<128x1xf32>
    %53 = arith.addf %49, %52 : vector<128x1xf32>
    %c0_22 = arith.constant 0 : index
    %c0_23 = arith.constant 0 : index
    %c0_24 = arith.constant 0 : index
    %54 = vector.load %arg7[%c0_22, %c0_23, %c0_24] : memref<1x128x1xf32, #tpu.memory_space<vmem>>, vector<1x128x1xf32>
    %55 = vector.shape_cast %54 : vector<1x128x1xf32> to vector<128x1xf32>
    %56 = vector.shape_cast %53 : vector<128x1xf32> to vector<1x128x1xf32>
    tpu.vector_store %arg7[%c0_22, %c0_23, %c0_24], %56 {strides = array<i32>} : memref<1x128x1xf32, #tpu.memory_space<vmem>>, vector<1x128x1xf32>,
    return
  }
  func.func @transform_0(%arg0: i32, %arg1: i32) -> (i32, i32, i32) {
    %c0_i32 = arith.constant 0 : i32
    %c0_i32_0 = arith.constant 0 : i32
    return %arg0, %c0_i32, %arg1 : i32, i32, i32
  }
  func.func @transform_1(%arg0: i32, %arg1: i32) -> (i32, i32) {
    %c0_i32 = arith.constant 0 : i32
    %c0_i32_0 = arith.constant 0 : i32
    %c0_i32_1 = arith.constant 0 : i32
    return %c0_i32, %c0_i32_0 : i32, i32
  }
  func.func @transform_2(%arg0: i32, %arg1: i32) -> (i32, i32) {
    %c0_i32 = arith.constant 0 : i32
    %c0_i32_0 = arith.constant 0 : i32
    %c0_i32_1 = arith.constant 0 : i32
    return %c0_i32, %c0_i32_0 : i32, i32
  }
  func.func @transform_3(%arg0: i32, %arg1: i32) -> (i32, i32) {
    %c0_i32 = arith.constant 0 : i32
    %c0_i32_0 = arith.constant 0 : i32
    %c0_i32_1 = arith.constant 0 : i32
    return %c0_i32, %c0_i32_0 : i32, i32
  }
  func.func @transform_4(%arg0: i32, %arg1: i32) -> (i32, i32, i32) {
    %c0_i32 = arith.constant 0 : i32
    %c0_i32_0 = arith.constant 0 : i32
    %c0_i32_1 = arith.constant 0 : i32
    return %arg0, %c0_i32, %c0_i32_0 : i32, i32, i32
  }
  func.func @transform_5(%arg0: i32, %arg1: i32) -> (i32, i32, i32) {
    %c0_i32 = arith.constant 0 : i32
    %c0_i32_0 = arith.constant 0 : i32
    %c0_i32_1 = arith.constant 0 : i32
    return %arg0, %c0_i32, %c0_i32_0 : i32, i32, i32
  }
}

module attributes {stable_mosaic.version = 11 : i64} {
  func.func @_apply_kernel(%arg0: i32, %arg1: i32, %arg2: memref<1x4x256xf32, #tpu.memory_space<vmem>>, %arg3: memref<64x4xf32, #tpu.memory_space<vmem>>, %arg4: memref<64x1xf32, #tpu.memory_space<vmem>>, %arg5: memref<128x64xbf16, #tpu.memory_space<vmem>>, %arg6: memref<128x1xf32, #tpu.memory_space<vmem>>, %arg7: memref<128x1xf32, #tpu.memory_space<vmem>>, %arg8: memref<8x128xbf16, #tpu.memory_space<vmem>>, %arg9: memref<1x1x256xf32, #tpu.memory_space<vmem>>) attributes {dimension_semantics = [#tpu.dimension_semantics<parallel>, #tpu.dimension_semantics<parallel>], iteration_bounds = array<i64: 2, 1>, scalar_prefetch = 0 : i64, scratch_operands = 0 : i64, tpu.core_type = #tpu.core_type<tc>, window_params = [{transform_indices = @transform_0, window_bounds = array<i64: 1, 4, 256>}, {pipeline_mode = #tpu.pipeline_mode<synchronous>, transform_indices = @transform_1, window_bounds = array<i64: 64, 4>}, {pipeline_mode = #tpu.pipeline_mode<synchronous>, transform_indices = @transform_2, window_bounds = array<i64: 64, 1>}, {pipeline_mode = #tpu.pipeline_mode<synchronous>, transform_indices = @transform_3, window_bounds = array<i64: 128, 64>}, {pipeline_mode = #tpu.pipeline_mode<synchronous>, transform_indices = @transform_4, window_bounds = array<i64: 128, 1>}, {pipeline_mode = #tpu.pipeline_mode<synchronous>, transform_indices = @transform_5, window_bounds = array<i64: 128, 1>}, {pipeline_mode = #tpu.pipeline_mode<synchronous>, transform_indices = @transform_6, window_bounds = array<i64: 8, 128>}, {transform_indices = @transform_7, window_bounds = array<i64: 1, 1, 256>}]} {
    %c0 = arith.constant 0 : index
    %c0_0 = arith.constant 0 : index
    %c0_1 = arith.constant 0 : index
    %0 = vector.load %arg2[%c0, %c0_0, %c0_1] : memref<1x4x256xf32, #tpu.memory_space<vmem>>, vector<1x4x256xf32>
    %1 = vector.shape_cast %0 : vector<1x4x256xf32> to vector<4x256xf32>
    %c0_2 = arith.constant 0 : index
    %c0_3 = arith.constant 0 : index
    %2 = vector.load %arg3[%c0_2, %c0_3] : memref<64x4xf32, #tpu.memory_space<vmem>>, vector<64x4xf32>
    %c0_4 = arith.constant 0 : index
    %c0_5 = arith.constant 0 : index
    %3 = vector.load %arg4[%c0_4, %c0_5] : memref<64x1xf32, #tpu.memory_space<vmem>>, vector<64x1xf32>
    %4 = vector.extract_strided_slice %2 {offsets = [0, 0], sizes = [64, 1], strides = [1, 1]} : vector<64x4xf32> to vector<64x1xf32>
    %5 = vector.extract_strided_slice %1 {offsets = [0, 0], sizes = [1, 256], strides = [1, 1]} : vector<4x256xf32> to vector<1x256xf32>
    %6 = vector.broadcast %4 : vector<64x1xf32> to vector<64x256xf32>
    %7 = vector.broadcast %5 : vector<1x256xf32> to vector<64x256xf32>
    %8 = arith.mulf %6, %7 : vector<64x256xf32>
    %9 = vector.broadcast %3 : vector<64x1xf32> to vector<64x256xf32>
    %10 = arith.addf %9, %8 : vector<64x256xf32>
    %11 = vector.extract_strided_slice %2 {offsets = [0, 1], sizes = [64, 1], strides = [1, 1]} : vector<64x4xf32> to vector<64x1xf32>
    %12 = vector.extract_strided_slice %1 {offsets = [1, 0], sizes = [1, 256], strides = [1, 1]} : vector<4x256xf32> to vector<1x256xf32>
    %13 = vector.broadcast %11 : vector<64x1xf32> to vector<64x256xf32>
    %14 = vector.broadcast %12 : vector<1x256xf32> to vector<64x256xf32>
    %15 = arith.mulf %13, %14 : vector<64x256xf32>
    %16 = arith.addf %10, %15 : vector<64x256xf32>
    %17 = vector.extract_strided_slice %2 {offsets = [0, 2], sizes = [64, 1], strides = [1, 1]} : vector<64x4xf32> to vector<64x1xf32>
    %18 = vector.extract_strided_slice %1 {offsets = [2, 0], sizes = [1, 256], strides = [1, 1]} : vector<4x256xf32> to vector<1x256xf32>
    %19 = vector.broadcast %17 : vector<64x1xf32> to vector<64x256xf32>
    %20 = vector.broadcast %18 : vector<1x256xf32> to vector<64x256xf32>
    %21 = arith.mulf %19, %20 : vector<64x256xf32>
    %22 = arith.addf %16, %21 : vector<64x256xf32>
    %23 = vector.extract_strided_slice %2 {offsets = [0, 3], sizes = [64, 1], strides = [1, 1]} : vector<64x4xf32> to vector<64x1xf32>
    %24 = vector.extract_strided_slice %1 {offsets = [3, 0], sizes = [1, 256], strides = [1, 1]} : vector<4x256xf32> to vector<1x256xf32>
    %25 = vector.broadcast %23 : vector<64x1xf32> to vector<64x256xf32>
    %26 = vector.broadcast %24 : vector<1x256xf32> to vector<64x256xf32>
    %27 = arith.mulf %25, %26 : vector<64x256xf32>
    %28 = arith.addf %22, %27 : vector<64x256xf32>
    %cst = arith.constant 0.000000e+00 : f32
    %29 = vector.broadcast %cst : f32 to vector<64x256xf32>
    %30 = arith.cmpf oge, %28, %29 : vector<64x256xf32>
    %cst_6 = arith.constant 2.000000e-01 : f32
    %31 = vector.broadcast %cst_6 : f32 to vector<64x256xf32>
    %32 = arith.mulf %31, %28 : vector<64x256xf32>
    %33 = arith.select %30, %28, %32 : vector<64x256xi1>, vector<64x256xf32>
    %c0_7 = arith.constant 0 : index
    %c0_8 = arith.constant 0 : index
    %34 = vector.load %arg5[%c0_7, %c0_8] : memref<128x64xbf16, #tpu.memory_space<vmem>>, vector<128x64xbf16>
    %35 = arith.truncf %33 : vector<64x256xf32> to vector<64x256xbf16>
    %cst_9 = arith.constant dense<0.000000e+00> : vector<128x256xf32>
    %36 = tpu.matmul %34, %35, %cst_9 {dimension_numbers = #tpu.dot_dimension_numbers<[1], [0], [0], [1], [0, 0, 1, 1], [], []>} : vector<128x64xbf16>, vector<64x256xbf16>, vector<128x256xf32> -> vector<128x256xf32>
    %c0_10 = arith.constant 0 : index
    %c0_11 = arith.constant 0 : index
    %37 = vector.load %arg6[%c0_10, %c0_11] : memref<128x1xf32, #tpu.memory_space<vmem>>, vector<128x1xf32>
    %38 = vector.broadcast %37 : vector<128x1xf32> to vector<128x256xf32>
    %39 = arith.mulf %36, %38 : vector<128x256xf32>
    %c0_12 = arith.constant 0 : index
    %c0_13 = arith.constant 0 : index
    %40 = vector.load %arg7[%c0_12, %c0_13] : memref<128x1xf32, #tpu.memory_space<vmem>>, vector<128x1xf32>
    %41 = vector.broadcast %40 : vector<128x1xf32> to vector<128x256xf32>
    %42 = arith.addf %39, %41 : vector<128x256xf32>
    %cst_14 = arith.constant 0.000000e+00 : f32
    %43 = vector.broadcast %cst_14 : f32 to vector<128x256xf32>
    %44 = arith.cmpf oge, %42, %43 : vector<128x256xf32>
    %cst_15 = arith.constant 2.000000e-01 : f32
    %45 = vector.broadcast %cst_15 : f32 to vector<128x256xf32>
    %46 = arith.mulf %45, %42 : vector<128x256xf32>
    %47 = arith.select %44, %42, %46 : vector<128x256xi1>, vector<128x256xf32>
    %c0_16 = arith.constant 0 : index
    %c0_17 = arith.constant 0 : index
    %48 = vector.load %arg8[%c0_16, %c0_17] : memref<8x128xbf16, #tpu.memory_space<vmem>>, vector<8x128xbf16>
    %49 = arith.truncf %47 : vector<128x256xf32> to vector<128x256xbf16>
    %cst_18 = arith.constant dense<0.000000e+00> : vector<8x256xf32>
    %50 = tpu.matmul %48, %49, %cst_18 {dimension_numbers = #tpu.dot_dimension_numbers<[1], [0], [0], [1], [0, 0, 1, 1], [], []>} : vector<8x128xbf16>, vector<128x256xbf16>, vector<8x256xf32> -> vector<8x256xf32>
    %51 = vector.extract_strided_slice %50 {offsets = [0, 0], sizes = [1, 256], strides = [1, 1]} : vector<8x256xf32> to vector<1x256xf32>
    %c0_19 = arith.constant 0 : index
    %c0_20 = arith.constant 0 : index
    %c0_21 = arith.constant 0 : index
    %52 = vector.load %arg9[%c0_19, %c0_20, %c0_21] : memref<1x1x256xf32, #tpu.memory_space<vmem>>, vector<1x1x256xf32>
    %53 = vector.shape_cast %52 : vector<1x1x256xf32> to vector<1x256xf32>
    %54 = vector.shape_cast %51 : vector<1x256xf32> to vector<1x1x256xf32>
    tpu.vector_store %arg9[%c0_19, %c0_20, %c0_21], %54 {strides = array<i32>} : memref<1x1x256xf32, #tpu.memory_space<vmem>>, vector<1x1x256xf32>,
    return
  }
  func.func @transform_0(%arg0: i32, %arg1: i32) -> (i32, i32, i32) {
    %c0_i32 = arith.constant 0 : i32
    %c0_i32_0 = arith.constant 0 : i32
    return %arg0, %c0_i32, %arg1 : i32, i32, i32
  }
  func.func @transform_1(%arg0: i32, %arg1: i32) -> (i32, i32) {
    %c0_i32 = arith.constant 0 : i32
    %c0_i32_0 = arith.constant 0 : i32
    %c0_i32_1 = arith.constant 0 : i32
    return %c0_i32, %c0_i32_0 : i32, i32
  }
  func.func @transform_2(%arg0: i32, %arg1: i32) -> (i32, i32) {
    %c0_i32 = arith.constant 0 : i32
    %c0_i32_0 = arith.constant 0 : i32
    %c0_i32_1 = arith.constant 0 : i32
    return %c0_i32, %c0_i32_0 : i32, i32
  }
  func.func @transform_3(%arg0: i32, %arg1: i32) -> (i32, i32) {
    %c0_i32 = arith.constant 0 : i32
    %c0_i32_0 = arith.constant 0 : i32
    %c0_i32_1 = arith.constant 0 : i32
    return %c0_i32, %c0_i32_0 : i32, i32
  }
  func.func @transform_4(%arg0: i32, %arg1: i32) -> (i32, i32) {
    %c0_i32 = arith.constant 0 : i32
    %c0_i32_0 = arith.constant 0 : i32
    %c0_i32_1 = arith.constant 0 : i32
    return %c0_i32, %c0_i32_0 : i32, i32
  }
  func.func @transform_5(%arg0: i32, %arg1: i32) -> (i32, i32) {
    %c0_i32 = arith.constant 0 : i32
    %c0_i32_0 = arith.constant 0 : i32
    %c0_i32_1 = arith.constant 0 : i32
    return %c0_i32, %c0_i32_0 : i32, i32
  }
  func.func @transform_6(%arg0: i32, %arg1: i32) -> (i32, i32) {
    %c0_i32 = arith.constant 0 : i32
    %c0_i32_0 = arith.constant 0 : i32
    %c0_i32_1 = arith.constant 0 : i32
    return %c0_i32, %c0_i32_0 : i32, i32
  }
  func.func @transform_7(%arg0: i32, %arg1: i32) -> (i32, i32, i32) {
    %c0_i32 = arith.constant 0 : i32
    %c0_i32_0 = arith.constant 0 : i32
    return %arg0, %c0_i32, %arg1 : i32, i32, i32
  }
}

</mosaic_0001>

<llo_original>
// kernel: pixel_discriminator_forward.2
$region0: #{pixel_discriminator_forward.2}
  #allocation0 [shape = 'u32[]', space=smem, size = 0x4, offset = 0x4, fixed_abs, tag = 'smem constant byte address 0x4 - core index']
  #allocation1 [shape = 'u32[72,128]{1,0:T(1,128)}', space=vmem, size = 0x9000, scoped, tag = 'internal scratch']
  %s0 = inlined_call_operand.vmem [shape: f32[2,4,256], index: 0, kind: input, shape index: {}]
  %s1 = inlined_call_operand.vmem [shape: f32[64,4], index: 1, kind: input, shape index: {}]
  %s2 = inlined_call_operand.vmem [shape: f32[64,1], index: 2, kind: input, shape index: {}]
  %s3 = inlined_call_operand.vmem [shape: bf16[128,64], index: 3, kind: input, shape index: {}]
  %s4 = inlined_call_operand.vmem [shape: f32[2,128,1], index: 4, kind: output, shape index: {0}]
  %s5 = inlined_call_operand.vmem [shape: f32[2,128,1], index: 5, kind: output, shape index: {1}]
  %6 = xla_tuple %s4, %s5
  %s7 = sld [smem:[#allocation0]]
  $region61: #{pixel_discriminator_forward.2} parent=0
    _
  %s9 = ssub.s32 1, %s7
  %s10 = scalar_select 0, %s9, %s7
  loop: start=0, step=1, limit=4
  $region2: #{pixel_discriminator_forward.2} parent=0 // loop_pre_header
    _
  $region3: #{pixel_discriminator_forward.2} parent=0 // loop_header
    %s12 = sphi 0, %s16
    %p13 = scmp.ge.s32.totalorder %s12, 4
    %s19 = sphi 0, %s31
    %s20 = sphi 0, %s27
    %s21 = sphi 0, %s19
    %s22 = sphi 0, %s20
    %s23 = sphi 0, %s21
    %s24 = sphi 0, %s22
    %s36 = sphi 0, %s38
    %s39 = sphi 0, %s36
    %s40 = sphi 0, %s39
    %s56 = sphi 0, %s40
    %s60 = sphi 0, %s60
    %s62 = sphi 0, %s60
    %s63 = sphi 0, %s62
    %s77 = sphi 0, %s63
    %s81 = sphi 0, %s81
    %s83 = sphi 0, %s81
    %s84 = sphi 0, %s83
    %s98 = sphi 0, %s84
    %s102 = sphi 0, %s102
    %s104 = sphi 0, %s102
    %s105 = sphi 0, %s104
    %s119 = sphi 0, %s105
    %s125 = sphi 0, %s127
    %s128 = sphi 0, %s125
    %s129 = sphi 0, %s128
    %s145 = sphi 0, %s129
    %s151 = sphi 0, %s153
    %s154 = sphi 0, %s151
    %s155 = sphi 0, %s154
    %s171 = sphi 0, %s155
  $region4: #{pixel_discriminator_forward.2} parent=0 // loop_header_branch
    %15 = sbr.rel (%p13) target = $region8
  $region5: #{pixel_discriminator_forward.2} parent=0 // loop_body
    %s17 = ssub.s32 %s12, 1
    %s18 = ssub.s32 %s12, 2
    %s25 = sadd.s32 1, %s20
    %p26 = scmp.ge.s32.totalorder %s25, 1
    %s27 = scalar_select %p26, 0, %s25
    %s28 = sadd.s32 1, %s19
    %s29 = scalar_select %p26, %s28, %s19
    %p30 = scmp.ge.s32.totalorder %s29, 2
    %s31 = scalar_select %p30, 0, %s29
    %s32 = ssub.s32 %s19, %s31
    %s33 = ssub.s32 %s20, %s27
    %s34 = sor.u32 %s32, %s33
    %p35 = scmp.eq.s32.totalorder %s34, 0
    %s37 = sadd.s32 %s36, 1
    %s38 = scalar_select %p35, %s36, %s37
    %p41 = pneg %p35
    %p42 = scmp.eq.s32.totalorder %s12, 1
    %p43 = por %p41, %p42
    %p44 = scmp.ne.s32.totalorder %s36, %s39
    %p45 = scmp.eq.s32.totalorder %s12, 0
    %p46 = por %p44, %p45
    %p47 = scmp.ne.s32.totalorder %s36, %s39
    %p48 = scmp.eq.s32.totalorder %s17, 1
    %p49 = por %p47, %p48
    %p50 = scmp.ne.s32.totalorder %s39, %s40
    %p51 = scmp.eq.s32.totalorder %s17, 0
    %p52 = por %p50, %p51
    %p53 = scmp.ne.s32.totalorder %s39, %s40
    %p54 = scmp.eq.s32.totalorder %s18, 1
    %p55 = por %p53, %p54
    %p57 = scmp.ne.s32.totalorder %s40, %s56
    %p58 = scmp.eq.s32.totalorder %s18, 0
    %p59 = por %p57, %p58
    %s61 = sadd.s32 %s60, 1
    %p64 = scmp.eq.s32.totalorder %s12, 1
    %p65 = scmp.ne.s32.totalorder %s60, %s62
    %p66 = scmp.eq.s32.totalorder %s12, 0
    %p67 = por %p65, %p66
    %p68 = scmp.ne.s32.totalorder %s60, %s62
    %p69 = scmp.eq.s32.totalorder %s17, 1
    %p70 = por %p68, %p69
    %p71 = scmp.ne.s32.totalorder %s62, %s63
    %p72 = scmp.eq.s32.totalorder %s17, 0
    %p73 = por %p71, %p72
    %p74 = scmp.ne.s32.totalorder %s62, %s63
    %p75 = scmp.eq.s32.totalorder %s18, 1
    %p76 = por %p74, %p75
    %p78 = scmp.ne.s32.totalorder %s63, %s77
    %p79 = scmp.eq.s32.totalorder %s18, 0
    %p80 = por %p78, %p79
    %s82 = sadd.s32 %s81, 1
    %p85 = scmp.eq.s32.totalorder %s12, 1
    %p86 = scmp.ne.s32.totalorder %s81, %s83
    %p87 = scmp.eq.s32.totalorder %s12, 0
    %p88 = por %p86, %p87
    %p89 = scmp.ne.s32.totalorder %s81, %s83
    %p90 = scmp.eq.s32.totalorder %s17, 1
    %p91 = por %p89, %p90
    %p92 = scmp.ne.s32.totalorder %s83, %s84
    %p93 = scmp.eq.s32.totalorder %s17, 0
    %p94 = por %p92, %p93
    %p95 = scmp.ne.s32.totalorder %s83, %s84
    %p96 = scmp.eq.s32.totalorder %s18, 1
    %p97 = por %p95, %p96
    %p99 = scmp.ne.s32.totalorder %s84, %s98
    %p100 = scmp.eq.s32.totalorder %s18, 0
    %p101 = por %p99, %p100
    %s103 = sadd.s32 %s102, 1
    %p106 = scmp.eq.s32.totalorder %s12, 1
    %p107 = scmp.ne.s32.totalorder %s102, %s104
    %p108 = scmp.eq.s32.totalorder %s12, 0
    %p109 = por %p107, %p108
    %p110 = scmp.ne.s32.totalorder %s102, %s104
    %p111 = scmp.eq.s32.totalorder %s17, 1
    %p112 = por %p110, %p111
    %p113 = scmp.ne.s32.totalorder %s104, %s105
    %p114 = scmp.eq.s32.totalorder %s17, 0
    %p115 = por %p113, %p114
    %p116 = scmp.ne.s32.totalorder %s104, %s105
    %p117 = scmp.eq.s32.totalorder %s18, 1
    %p118 = por %p116, %p117
    %p120 = scmp.ne.s32.totalorder %s105, %s119
    %p121 = scmp.eq.s32.totalorder %s18, 0
    %p122 = por %p120, %p121
    %s123 = ssub.s32 %s19, %s31
    %p124 = scmp.eq.s32.totalorder %s123, 0
    %s126 = sadd.s32 %s125, 1
    %s127 = scalar_select %p124, %s125, %s126
    %p130 = pneg %p124
    %p131 = scmp.eq.s32.totalorder %s12, 1
    %p132 = por %p130, %p131
    %p133 = scmp.ne.s32.totalorder %s125, %s128
    %p134 = scmp.eq.s32.totalorder %s12, 0
    %p135 = por %p133, %p134
    %p136 = scmp.ne.s32.totalorder %s125, %s128
    %p137 = scmp.eq.s32.totalorder %s17, 1
    %p138 = por %p136, %p137
    %p139 = scmp.ne.s32.totalorder %s128, %s129
    %p140 = scmp.eq.s32.totalorder %s17, 0
    %p141 = por %p139, %p140
    %p142 = scmp.ne.s32.totalorder %s128, %s129
    %p143 = scmp.eq.s32.totalorder %s18, 1
    %p144 = por %p142, %p143
    %p146 = scmp.ne.s32.totalorder %s129, %s145
    %p147 = scmp.eq.s32.totalorder %s18, 0
    %p148 = por %p146, %p147
    %s149 = ssub.s32 %s19, %s31
    %p150 = scmp.eq.s32.totalorder %s149, 0
    %s152 = sadd.s32 %s151, 1
    %s153 = scalar_select %p150, %s151, %s152
    %p156 = pneg %p150
    %p157 = scmp.eq.s32.totalorder %s12, 1
    %p158 = por %p156, %p157
    %p159 = scmp.ne.s32.totalorder %s151, %s154
    %p160 = scmp.eq.s32.totalorder %s12, 0
    %p161 = por %p159, %p160
    %p162 = scmp.ne.s32.totalorder %s151, %s154
    %p163 = scmp.eq.s32.totalorder %s17, 1
    %p164 = por %p162, %p163
    %p165 = scmp.ne.s32.totalorder %s154, %s155
    %p166 = scmp.eq.s32.totalorder %s17, 0
    %p167 = por %p165, %p166
    %p168 = scmp.ne.s32.totalorder %s154, %s155
    %p169 = scmp.eq.s32.totalorder %s18, 1
    %p170 = por %p168, %p169
    %p172 = scmp.ne.s32.totalorder %s155, %s171
    %p173 = scmp.eq.s32.totalorder %s18, 0
    %p174 = por %p172, %p173
    %p175 = scmp.le.s32.totalorder 1, %s12
    %p176 = scmp.lt.s32.totalorder %s12, 3
    %p177 = pnand %p175, %p176
    %p178 = pneg %p177
    // Predicated region
    $region9: #{pixel_discriminator_forward.2} parent=5 // pred_check
      _
    $region10: #{pixel_discriminator_forward.2} parent=5 // pred_check_branch
      %180 = sbr.rel (%p177) target = $region12
    $region11: #{pixel_discriminator_forward.2} parent=5 // pred_region
      %s181 = ssub.s32 %s12, 1
      // Predicated region
      $region13: #{pixel_discriminator_forward.2} parent=11 // pred_check
        %p182 = pneg %p73
      $region14: #{pixel_discriminator_forward.2} parent=11 // pred_check_branch
        %184 = sbr.rel (%p182) target = $region16
      $region15: #{pixel_discriminator_forward.2} parent=11 // pred_region
        _
      $region16: #{pixel_discriminator_forward.2} parent=11 // pred_fallthru
        _
      // Predicated region
      $region17: #{pixel_discriminator_forward.2} parent=11 // pred_check
        %p185 = pneg %p94
      $region18: #{pixel_discriminator_forward.2} parent=11 // pred_check_branch
        %187 = sbr.rel (%p185) target = $region20
      $region19: #{pixel_discriminator_forward.2} parent=11 // pred_region
        _
      $region20: #{pixel_discriminator_forward.2} parent=11 // pred_fallthru
        _
      // Predicated region
      $region21: #{pixel_discriminator_forward.2} parent=11 // pred_check
        %p188 = pneg %p115
      $region22: #{pixel_discriminator_forward.2} parent=11 // pred_check_branch
        %190 = sbr.rel (%p188) target = $region24
      $region23: #{pixel_discriminator_forward.2} parent=11 // pred_region
        _
      $region24: #{pixel_discriminator_forward.2} parent=11 // pred_fallthru
        _
    $region12: #{pixel_discriminator_forward.2} parent=5 // pred_fallthru
      _
    %p191 = scmp.lt.s32.totalorder %s12, 2
    // Predicated region
    $region25: #{pixel_discriminator_forward.2} parent=5 // pred_check
      %p192 = pneg %p191
    $region26: #{pixel_discriminator_forward.2} parent=5 // pred_check_branch
      %194 = sbr.rel (%p192) target = $region28
    $region27: #{pixel_discriminator_forward.2} parent=5 // pred_region
      // Predicated region
      $region29: #{pixel_discriminator_forward.2} parent=27 // pred_check
        %p195 = pneg %p46
      $region30: #{pixel_discriminator_forward.2} parent=27 // pred_check_branch
        %197 = sbr.rel (%p195) target = $region32
      $region31: #{pixel_discriminator_forward.2} parent=27 // pred_region
        %s198 = smul.u32 2, %s20
        %p199 = scmp.lt.s32.totalorder %s19, 1
        %s200 = scalar_select %p199, %s19, 1
        %p201 = scmp.lt.s32.totalorder %s198, 1
        %s202 = scalar_select %p201, %s198, 1
        %s203 = smul.addr %s200, 2
        %s204 = sadd.s32 %s202, %s203
        %s205 = smul.addr %s204, 4
        %s206 = scalar_lea.vmem %s0, %s205
        %s207 = smul.u32 2, %s20
      $region32: #{pixel_discriminator_forward.2} parent=27 // pred_fallthru
        _
    $region28: #{pixel_discriminator_forward.2} parent=5 // pred_fallthru
      _
    %p208 = scmp.le.s32.totalorder 1, %s12
    %p209 = scmp.lt.s32.totalorder %s12, 3
    %p210 = pnand %p208, %p209
    %p211 = pneg %p210
    // Predicated region
    $region33: #{pixel_discriminator_forward.2} parent=5 // pred_check
      _
    $region34: #{pixel_discriminator_forward.2} parent=5 // pred_check_branch
      %213 = sbr.rel (%p210) target = $region36
    $region35: #{pixel_discriminator_forward.2} parent=5 // pred_region
      %s214 = ssub.s32 %s12, 1
      %s215 = smul.u32 2, %s22
      %p216 = scmp.lt.s32.totalorder %s21, 1
      %s217 = scalar_select %p216, %s21, 1
      %p218 = scmp.lt.s32.totalorder %s215, 1
      %s219 = scalar_select %p218, %s215, 1
      %s220 = smul.addr %s217, 2
      %s221 = sadd.s32 %s219, %s220
      %s222 = smul.addr %s221, 4
      %s223 = scalar_lea.vmem %s0, %s222
      %p224 = pneg %p52
      %p225 = pneg %p49
      %p226 = pneg %p73
      %p227 = pneg %p70
      %p228 = pneg %p94
      %p229 = pneg %p91
      %p230 = pneg %p115
      %p231 = pneg %p112
      %p232 = pneg %p141
      %p233 = pneg %p138
      %p234 = scmp.lt.s32.totalorder %s21, 1
      %s235 = scalar_select %p234, %s21, 1
      %s236 = smul.addr %s235, 16
      %s237 = smul.addr %s236, 8
      %s238 = scalar_lea.vmem %s4, %s237
      %p239 = pneg %p167
      %p240 = pneg %p164
      %p241 = scmp.lt.s32.totalorder %s21, 1
      %s242 = scalar_select %p241, %s21, 1
      %s243 = smul.addr %s242, 16
      %s244 = smul.addr %s243, 8
      %s245 = scalar_lea.vmem %s5, %s244
      %s246 = smul.u32 2, %s22
      %p247 = scmp.lt.s32.totalorder %s21, 1
      %s248 = scalar_select %p247, %s21, 1
      %p249 = scmp.lt.s32.totalorder %s246, 1
      %s250 = scalar_select %p249, %s246, 1
      %s251 = smul.addr %s248, 2
      %s252 = sadd.s32 %s250, %s251
      %s253 = smul.addr %s252, 4
      %s254 = scalar_lea.vmem %s0, %s253
      %s255 = smul.u32 2, %s22
      %p256 = scmp.lt.s32.totalorder %s21, 1
      %s257 = scalar_select %p256, %s21, 1
      %s258 = smul.addr %s257, 16
      %s259 = smul.addr %s258, 8
      %s260 = scalar_lea.vmem %s4, %s259
      %p261 = scmp.lt.s32.totalorder %s21, 1
      %s262 = scalar_select %p261, %s21, 1
      %s263 = smul.addr %s262, 16
      %s264 = smul.addr %s263, 8
      %s265 = scalar_lea.vmem %s5, %s264
      %p267 = scmp.eq.s32.totalorder %s22, 0
      // Predicated region
      $region37: #{pixel_discriminator_forward.2} parent=35 // pred_check
        %p268 = pneg %p267
      $region38: #{pixel_discriminator_forward.2} parent=35 // pred_check_branch
        %270 = sbr.rel (%p268) target = $region40
      $region39: #{pixel_discriminator_forward.2} parent=35 // pred_region
        %vm271 = vcmask 7168
        %272 = vst.msk [vmem:[%s260] sm:$0xff] %vm271, 0.0
        %273 = vst.msk [vmem:[%s260 + $0x8] sm:$0xff] %vm271, 0.0
        %274 = vst.msk [vmem:[%s260 + $0x10] sm:$0xff] %vm271, 0.0
        %275 = vst.msk [vmem:[%s260 + $0x18] sm:$0xff] %vm271, 0.0
        %276 = vst.msk [vmem:[%s260 + $0x20] sm:$0xff] %vm271, 0.0
        %277 = vst.msk [vmem:[%s260 + $0x28] sm:$0xff] %vm271, 0.0
        %278 = vst.msk [vmem:[%s260 + $0x30] sm:$0xff] %vm271, 0.0
        %279 = vst.msk [vmem:[%s260 + $0x38] sm:$0xff] %vm271, 0.0
        %280 = vst.msk [vmem:[%s260 + $0x40] sm:$0xff] %vm271, 0.0
        %281 = vst.msk [vmem:[%s260 + $0x48] sm:$0xff] %vm271, 0.0
        %282 = vst.msk [vmem:[%s260 + $0x50] sm:$0xff] %vm271, 0.0
        %283 = vst.msk [vmem:[%s260 + $0x58] sm:$0xff] %vm271, 0.0
        %284 = vst.msk [vmem:[%s260 + $0x60] sm:$0xff] %vm271, 0.0
        %285 = vst.msk [vmem:[%s260 + $0x68] sm:$0xff] %vm271, 0.0
        %286 = vst.msk [vmem:[%s260 + $0x70] sm:$0xff] %vm271, 0.0
        %287 = vst.msk [vmem:[%s260 + $0x78] sm:$0xff] %vm271, 0.0
        %288 = vst.msk [vmem:[%s265] sm:$0xff] %vm271, 0.0
        %289 = vst.msk [vmem:[%s265 + $0x8] sm:$0xff] %vm271, 0.0
        %290 = vst.msk [vmem:[%s265 + $0x10] sm:$0xff] %vm271, 0.0
        %291 = vst.msk [vmem:[%s265 + $0x18] sm:$0xff] %vm271, 0.0
        %292 = vst.msk [vmem:[%s265 + $0x20] sm:$0xff] %vm271, 0.0
        %293 = vst.msk [vmem:[%s265 + $0x28] sm:$0xff] %vm271, 0.0
        %294 = vst.msk [vmem:[%s265 + $0x30] sm:$0xff] %vm271, 0.0
        %295 = vst.msk [vmem:[%s265 + $0x38] sm:$0xff] %vm271, 0.0
        %296 = vst.msk [vmem:[%s265 + $0x40] sm:$0xff] %vm271, 0.0
        %297 = vst.msk [vmem:[%s265 + $0x48] sm:$0xff] %vm271, 0.0
        %298 = vst.msk [vmem:[%s265 + $0x50] sm:$0xff] %vm271, 0.0
        %299 = vst.msk [vmem:[%s265 + $0x58] sm:$0xff] %vm271, 0.0
        %300 = vst.msk [vmem:[%s265 + $0x60] sm:$0xff] %vm271, 0.0
        %301 = vst.msk [vmem:[%s265 + $0x68] sm:$0xff] %vm271, 0.0
        %302 = vst.msk [vmem:[%s265 + $0x70] sm:$0xff] %vm271, 0.0
        %303 = vst.msk [vmem:[%s265 + $0x78] sm:$0xff] %vm271, 0.0
      $region40: #{pixel_discriminator_forward.2} parent=35 // pred_fallthru
        _
      %v304 = vld [vmem:[%s254] sm:$0xff]
      %v305 = vld [vmem:[%s1] sm:$0xff]
      %v306 = vld [vmem:[%s1 + $0x8] sm:$0xff]
      %v307 = vld [vmem:[%s1 + $0x10] sm:$0xff]
      %v308 = vld [vmem:[%s1 + $0x18] sm:$0xff]
      %v309 = vld [vmem:[%s1 + $0x20] sm:$0xff]
      %v310 = vld [vmem:[%s1 + $0x28] sm:$0xff]
      %v311 = vld [vmem:[%s1 + $0x30] sm:$0xff]
      %v312 = vld [vmem:[%s1 + $0x38] sm:$0xff]
      %v313 = vld [vmem:[%s2] sm:$0xff]
      %v314 = vld [vmem:[%s2 + $0x8] sm:$0xff]
      %v315 = vld [vmem:[%s2 + $0x10] sm:$0xff]
      %v316 = vld [vmem:[%s2 + $0x18] sm:$0xff]
      %v317 = vld [vmem:[%s2 + $0x20] sm:$0xff]
      %v318 = vld [vmem:[%s2 + $0x28] sm:$0xff]
      %v319 = vld [vmem:[%s2 + $0x30] sm:$0xff]
      %v320 = vld [vmem:[%s2 + $0x38] sm:$0xff]
      %322 = vset.pattern.permute.xlu0 0
      %323 = vperm.xlu0 %322, %v305
      %v324 = vpop.permute.xlu0 %323
      %327 = vset.pattern.permute.xlu0 0
      %328 = vperm.xlu0 %327, %v306
      %v329 = vpop.permute.xlu0 %328
      %332 = vset.pattern.permute.xlu0 0
      %333 = vperm.xlu0 %332, %v307
      %v334 = vpop.permute.xlu0 %333
      %337 = vset.pattern.permute.xlu0 0
      %338 = vperm.xlu0 %337, %v308
      %v339 = vpop.permute.xlu0 %338
      %342 = vset.pattern.permute.xlu0 0
      %343 = vperm.xlu0 %342, %v309
      %v344 = vpop.permute.xlu0 %343
      %347 = vset.pattern.permute.xlu0 0
      %348 = vperm.xlu0 %347, %v310
      %v349 = vpop.permute.xlu0 %348
      %352 = vset.pattern.permute.xlu0 0
      %353 = vperm.xlu0 %352, %v311
      %v354 = vpop.permute.xlu0 %353
      %357 = vset.pattern.permute.xlu0 0
      %358 = vperm.xlu0 %357, %v312
      %v359 = vpop.permute.xlu0 %358
      %v362 = vperm.slane %v304, 0
      %v363 = vperm.slane %v304, 4
      %v366 = vperm.slane %v362, 0
      %v367 = vperm.slane %v363, 0
      %v368 = vmul.f32 %v324, %v366
      %v369 = vmul.f32 %v324, %v367
      %v370 = vmul.f32 %v329, %v366
      %v371 = vmul.f32 %v329, %v367
      %v372 = vmul.f32 %v334, %v366
      %v373 = vmul.f32 %v334, %v367
      %v374 = vmul.f32 %v339, %v366
      %v375 = vmul.f32 %v339, %v367
      %v376 = vmul.f32 %v344, %v366
      %v377 = vmul.f32 %v344, %v367
      %v378 = vmul.f32 %v349, %v366
      %v379 = vmul.f32 %v349, %v367
      %v380 = vmul.f32 %v354, %v366
      %v381 = vmul.f32 %v354, %v367
      %v382 = vmul.f32 %v359, %v366
      %v383 = vmul.f32 %v359, %v367
      %385 = vset.pattern.permute.xlu0 0
      %386 = vperm.xlu0 %385, %v313
      %v387 = vpop.permute.xlu0 %386
      %390 = vset.pattern.permute.xlu0 0
      %391 = vperm.xlu0 %390, %v314
      %v392 = vpop.permute.xlu0 %391
      %395 = vset.pattern.permute.xlu0 0
      %396 = vperm.xlu0 %395, %v315
      %v397 = vpop.permute.xlu0 %396
      %400 = vset.pattern.permute.xlu0 0
      %401 = vperm.xlu0 %400, %v316
      %v402 = vpop.permute.xlu0 %401
      %405 = vset.pattern.permute.xlu0 0
      %406 = vperm.xlu0 %405, %v317
      %v407 = vpop.permute.xlu0 %406
      %410 = vset.pattern.permute.xlu0 0
      %411 = vperm.xlu0 %410, %v318
      %v412 = vpop.permute.xlu0 %411
      %415 = vset.pattern.permute.xlu0 0
      %416 = vperm.xlu0 %415, %v319
      %v417 = vpop.permute.xlu0 %416
      %420 = vset.pattern.permute.xlu0 0
      %421 = vperm.xlu0 %420, %v320
      %v422 = vpop.permute.xlu0 %421
      %v424 = vadd.f32 %v387, %v368
      %v425 = vadd.f32 %v387, %v369
      %v426 = vadd.f32 %v392, %v370
      %v427 = vadd.f32 %v392, %v371
      %v428 = vadd.f32 %v397, %v372
      %v429 = vadd.f32 %v397, %v373
      %v430 = vadd.f32 %v402, %v374
      %v431 = vadd.f32 %v402, %v375
      %v432 = vadd.f32 %v407, %v376
      %v433 = vadd.f32 %v407, %v377
      %v434 = vadd.f32 %v412, %v378
      %v435 = vadd.f32 %v412, %v379
      %v436 = vadd.f32 %v417, %v380
      %v437 = vadd.f32 %v417, %v381
      %v438 = vadd.f32 %v422, %v382
      %v439 = vadd.f32 %v422, %v383
      %440 = vset.pattern.permute.xlu0 1
      %441 = vperm.xlu0 %440, %v305
      %v442 = vpop.permute.xlu0 %441
      %444 = vset.pattern.permute.xlu0 1
      %445 = vperm.xlu0 %444, %v306
      %v446 = vpop.permute.xlu0 %445
      %448 = vset.pattern.permute.xlu0 1
      %449 = vperm.xlu0 %448, %v307
      %v450 = vpop.permute.xlu0 %449
      %452 = vset.pattern.permute.xlu0 1
      %453 = vperm.xlu0 %452, %v308
      %v454 = vpop.permute.xlu0 %453
      %456 = vset.pattern.permute.xlu0 1
      %457 = vperm.xlu0 %456, %v309
      %v458 = vpop.permute.xlu0 %457
      %460 = vset.pattern.permute.xlu0 1
      %461 = vperm.xlu0 %460, %v310
      %v462 = vpop.permute.xlu0 %461
      %464 = vset.pattern.permute.xlu0 1
      %465 = vperm.xlu0 %464, %v311
      %v466 = vpop.permute.xlu0 %465
      %468 = vset.pattern.permute.xlu0 1
      %469 = vperm.xlu0 %468, %v312
      %v470 = vpop.permute.xlu0 %469
      %v472 = vperm.slane %v304, 1
      %v473 = vperm.slane %v304, 5
      %v476 = vperm.slane %v472, 1
      %v477 = vperm.slane %v473, 1
      %v478 = vmul.f32 %v442, %v476
      %v479 = vmul.f32 %v442, %v477
      %v480 = vmul.f32 %v446, %v476
      %v481 = vmul.f32 %v446, %v477
      %v482 = vmul.f32 %v450, %v476
      %v483 = vmul.f32 %v450, %v477
      %v484 = vmul.f32 %v454, %v476
      %v485 = vmul.f32 %v454, %v477
      %v486 = vmul.f32 %v458, %v476
      %v487 = vmul.f32 %v458, %v477
      %v488 = vmul.f32 %v462, %v476
      %v489 = vmul.f32 %v462, %v477
      %v490 = vmul.f32 %v466, %v476
      %v491 = vmul.f32 %v466, %v477
      %v492 = vmul.f32 %v470, %v476
      %v493 = vmul.f32 %v470, %v477
      %v494 = vadd.f32 %v424, %v478
      %v495 = vadd.f32 %v425, %v479
      %v496 = vadd.f32 %v426, %v480
      %v497 = vadd.f32 %v427, %v481
      %v498 = vadd.f32 %v428, %v482
      %v499 = vadd.f32 %v429, %v483
      %v500 = vadd.f32 %v430, %v484
      %v501 = vadd.f32 %v431, %v485
      %v502 = vadd.f32 %v432, %v486
      %v503 = vadd.f32 %v433, %v487
      %v504 = vadd.f32 %v434, %v488
      %v505 = vadd.f32 %v435, %v489
      %v506 = vadd.f32 %v436, %v490
      %v507 = vadd.f32 %v437, %v491
      %v508 = vadd.f32 %v438, %v492
      %v509 = vadd.f32 %v439, %v493
      %510 = vset.pattern.permute.xlu0 2
      %511 = vperm.xlu0 %510, %v305
      %v512 = vpop.permute.xlu0 %511
      %514 = vset.pattern.permute.xlu0 2
      %515 = vperm.xlu0 %514, %v306
      %v516 = vpop.permute.xlu0 %515
      %518 = vset.pattern.permute.xlu0 2
      %519 = vperm.xlu0 %518, %v307
      %v520 = vpop.permute.xlu0 %519
      %522 = vset.pattern.permute.xlu0 2
      %523 = vperm.xlu0 %522, %v308
      %v524 = vpop.permute.xlu0 %523
      %526 = vset.pattern.permute.xlu0 2
      %527 = vperm.xlu0 %526, %v309
      %v528 = vpop.permute.xlu0 %527
      %530 = vset.pattern.permute.xlu0 2
      %531 = vperm.xlu0 %530, %v310
      %v532 = vpop.permute.xlu0 %531
      %534 = vset.pattern.permute.xlu0 2
      %535 = vperm.xlu0 %534, %v311
      %v536 = vpop.permute.xlu0 %535
      %538 = vset.pattern.permute.xlu0 2
      %539 = vperm.xlu0 %538, %v312
      %v540 = vpop.permute.xlu0 %539
      %v542 = vperm.slane %v304, 2
      %v543 = vperm.slane %v304, 6
      %v546 = vperm.slane %v542, 2
      %v547 = vperm.slane %v543, 2
      %v548 = vmul.f32 %v512, %v546
      %v549 = vmul.f32 %v512, %v547
      %v550 = vmul.f32 %v516, %v546
      %v551 = vmul.f32 %v516, %v547
      %v552 = vmul.f32 %v520, %v546
      %v553 = vmul.f32 %v520, %v547
      %v554 = vmul.f32 %v524, %v546
      %v555 = vmul.f32 %v524, %v547
      %v556 = vmul.f32 %v528, %v546
      %v557 = vmul.f32 %v528, %v547
      %v558 = vmul.f32 %v532, %v546
      %v559 = vmul.f32 %v532, %v547
      %v560 = vmul.f32 %v536, %v546
      %v561 = vmul.f32 %v536, %v547
      %v562 = vmul.f32 %v540, %v546
      %v563 = vmul.f32 %v540, %v547
      %v564 = vadd.f32 %v494, %v548
      %v565 = vadd.f32 %v495, %v549
      %v566 = vadd.f32 %v496, %v550
      %v567 = vadd.f32 %v497, %v551
      %v568 = vadd.f32 %v498, %v552
      %v569 = vadd.f32 %v499, %v553
      %v570 = vadd.f32 %v500, %v554
      %v571 = vadd.f32 %v501, %v555
      %v572 = vadd.f32 %v502, %v556
      %v573 = vadd.f32 %v503, %v557
      %v574 = vadd.f32 %v504, %v558
      %v575 = vadd.f32 %v505, %v559
      %v576 = vadd.f32 %v506, %v560
      %v577 = vadd.f32 %v507, %v561
      %v578 = vadd.f32 %v508, %v562
      %v579 = vadd.f32 %v509, %v563
      %580 = vset.pattern.permute.xlu0 3
      %581 = vperm.xlu0 %580, %v305
      %v582 = vpop.permute.xlu0 %581
      %584 = vset.pattern.permute.xlu0 3
      %585 = vperm.xlu0 %584, %v306
      %v586 = vpop.permute.xlu0 %585
      %588 = vset.pattern.permute.xlu0 3
      %589 = vperm.xlu0 %588, %v307
      %v590 = vpop.permute.xlu0 %589
      %592 = vset.pattern.permute.xlu0 3
      %593 = vperm.xlu0 %592, %v308
      %v594 = vpop.permute.xlu0 %593
      %596 = vset.pattern.permute.xlu0 3
      %597 = vperm.xlu0 %596, %v309
      %v598 = vpop.permute.xlu0 %597
      %600 = vset.pattern.permute.xlu0 3
      %601 = vperm.xlu0 %600, %v310
      %v602 = vpop.permute.xlu0 %601
      %604 = vset.pattern.permute.xlu0 3
      %605 = vperm.xlu0 %604, %v311
      %v606 = vpop.permute.xlu0 %605
      %608 = vset.pattern.permute.xlu0 3
      %609 = vperm.xlu0 %608, %v312
      %v610 = vpop.permute.xlu0 %609
      %v612 = vperm.slane %v304, 3
      %v613 = vperm.slane %v304, 7
      %v616 = vperm.slane %v612, 3
      %v617 = vperm.slane %v613, 3
      %v618 = vmul.f32 %v582, %v616
      %v619 = vmul.f32 %v582, %v617
      %v620 = vmul.f32 %v586, %v616
      %v621 = vmul.f32 %v586, %v617
      %v622 = vmul.f32 %v590, %v616
      %v623 = vmul.f32 %v590, %v617
      %v624 = vmul.f32 %v594, %v616
      %v625 = vmul.f32 %v594, %v617
      %v626 = vmul.f32 %v598, %v616
      %v627 = vmul.f32 %v598, %v617
      %v628 = vmul.f32 %v602, %v616
      %v629 = vmul.f32 %v602, %v617
      %v630 = vmul.f32 %v606, %v616
      %v631 = vmul.f32 %v606, %v617
      %v632 = vmul.f32 %v610, %v616
      %v633 = vmul.f32 %v610, %v617
      %v634 = vadd.f32 %v564, %v618
      %v635 = vadd.f32 %v565, %v619
      %v636 = vadd.f32 %v566, %v620
      %v637 = vadd.f32 %v567, %v621
      %v638 = vadd.f32 %v568, %v622
      %v639 = vadd.f32 %v569, %v623
      %v640 = vadd.f32 %v570, %v624
      %v641 = vadd.f32 %v571, %v625
      %v642 = vadd.f32 %v572, %v626
      %v643 = vadd.f32 %v573, %v627
      %v644 = vadd.f32 %v574, %v628
      %v645 = vadd.f32 %v575, %v629
      %v646 = vadd.f32 %v576, %v630
      %v647 = vadd.f32 %v577, %v631
      %v648 = vadd.f32 %v578, %v632
      %v649 = vadd.f32 %v579, %v633
      %vm650 = vcmp.ge.f32.partialorder %v634, 0.0
      %vm651 = vcmp.ge.f32.partialorder %v635, 0.0
      %vm652 = vcmp.ge.f32.partialorder %v636, 0.0
      %vm653 = vcmp.ge.f32.partialorder %v637, 0.0
      %vm654 = vcmp.ge.f32.partialorder %v638, 0.0
      %vm655 = vcmp.ge.f32.partialorder %v639, 0.0
      %vm656 = vcmp.ge.f32.partialorder %v640, 0.0
      %vm657 = vcmp.ge.f32.partialorder %v641, 0.0
      %vm658 = vcmp.ge.f32.partialorder %v642, 0.0
      %vm659 = vcmp.ge.f32.partialorder %v643, 0.0
      %vm660 = vcmp.ge.f32.partialorder %v644, 0.0
      %vm661 = vcmp.ge.f32.partialorder %v645, 0.0
      %vm662 = vcmp.ge.f32.partialorder %v646, 0.0
      %vm663 = vcmp.ge.f32.partialorder %v647, 0.0
      %vm664 = vcmp.ge.f32.partialorder %v648, 0.0
      %vm665 = vcmp.ge.f32.partialorder %v649, 0.0
      %v666 = vmul.f32 %v634, 0.2
      %v667 = vmul.f32 %v635, 0.2
      %v668 = vmul.f32 %v636, 0.2
      %v669 = vmul.f32 %v637, 0.2
      %v670 = vmul.f32 %v638, 0.2
      %v671 = vmul.f32 %v639, 0.2
      %v672 = vmul.f32 %v640, 0.2
      %v673 = vmul.f32 %v641, 0.2
      %v674 = vmul.f32 %v642, 0.2
      %v675 = vmul.f32 %v643, 0.2
      %v676 = vmul.f32 %v644, 0.2
      %v677 = vmul.f32 %v645, 0.2
      %v678 = vmul.f32 %v646, 0.2
      %v679 = vmul.f32 %v647, 0.2
      %v680 = vmul.f32 %v648, 0.2
      %v681 = vmul.f32 %v649, 0.2
      %v682 = vsel %vm650, %v634, %v666
      %v683 = vsel %vm651, %v635, %v667
      %v684 = vsel %vm652, %v636, %v668
      %v685 = vsel %vm653, %v637, %v669
      %v686 = vsel %vm654, %v638, %v670
      %v687 = vsel %vm655, %v639, %v671
      %v688 = vsel %vm656, %v640, %v672
      %v689 = vsel %vm657, %v641, %v673
      %v690 = vsel %vm658, %v642, %v674
      %v691 = vsel %vm659, %v643, %v675
      %v692 = vsel %vm660, %v644, %v676
      %v693 = vsel %vm661, %v645, %v677
      %v694 = vsel %vm662, %v646, %v678
      %v695 = vsel %vm663, %v647, %v679
      %v696 = vsel %vm664, %v648, %v680
      %v697 = vsel %vm665, %v649, %v681
      %v698 = vld [vmem:[%s3] sm:$0xf]
      %v699 = vld [vmem:[%s3 + $0x4] sm:$0xf]
      %v700 = vld [vmem:[%s3 + $0x8] sm:$0xf]
      %v701 = vld [vmem:[%s3 + $0xc] sm:$0xf]
      %v702 = vld [vmem:[%s3 + $0x10] sm:$0xf]
      %v703 = vld [vmem:[%s3 + $0x14] sm:$0xf]
      %v704 = vld [vmem:[%s3 + $0x18] sm:$0xf]
      %v705 = vld [vmem:[%s3 + $0x1c] sm:$0xf]
      %v706 = vld [vmem:[%s3 + $0x20] sm:$0xf]
      %v707 = vld [vmem:[%s3 + $0x24] sm:$0xf]
      %v708 = vld [vmem:[%s3 + $0x28] sm:$0xf]
      %v709 = vld [vmem:[%s3 + $0x2c] sm:$0xf]
      %v710 = vld [vmem:[%s3 + $0x30] sm:$0xf]
      %v711 = vld [vmem:[%s3 + $0x34] sm:$0xf]
      %v712 = vld [vmem:[%s3 + $0x38] sm:$0xf]
      %v713 = vld [vmem:[%s3 + $0x3c] sm:$0xf]
      %v714 = vpack.c.bf16 %v684, %v682
      %v715 = vpack.c.bf16 %v685, %v683
      %v716 = vpack.c.bf16 %v688, %v686
      %v717 = vpack.c.bf16 %v689, %v687
      %v718 = vpack.c.bf16 %v692, %v690
      %v719 = vpack.c.bf16 %v693, %v691
      %v720 = vpack.c.bf16 %v696, %v694
      %v721 = vpack.c.bf16 %v697, %v695
      %v738 = vunpack.c.l.b16 %v698
      %v739 = vunpack.c.l.b16 %v699
      %v740 = vunpack.c.l.b16 %v700
      %v741 = vunpack.c.l.b16 %v701
      %v742 = vunpack.c.l.b16 %v702
      %v743 = vunpack.c.l.b16 %v703
      %v744 = vunpack.c.l.b16 %v704
      %v745 = vunpack.c.l.b16 %v705
      %v746 = vunpack.c.l.b16 %v706
      %v747 = vunpack.c.l.b16 %v707
      %v748 = vunpack.c.l.b16 %v708
      %v749 = vunpack.c.l.b16 %v709
      %v750 = vunpack.c.l.b16 %v710
      %v751 = vunpack.c.l.b16 %v711
      %v752 = vunpack.c.l.b16 %v712
      %v753 = vunpack.c.l.b16 %v713
      %v754 = vpack.c.b16 %v739, %v738
      %v755 = vpack.c.b16 %v741, %v740
      %v756 = vpack.c.b16 %v743, %v742
      %v757 = vpack.c.b16 %v745, %v744
      %v758 = vpack.c.b16 %v747, %v746
      %v759 = vpack.c.b16 %v749, %v748
      %v760 = vpack.c.b16 %v751, %v750
      %v761 = vpack.c.b16 %v753, %v752
      %vm762 = vcmask 523264
      %v764 = vsel %vm762, %v754, 0
      %v767 = vsel %vm762, %v755, 0
      %v770 = vsel %vm762, %v756, 0
      %v773 = vsel %vm762, %v757, 0
      %v776 = vsel %vm762, %v758, 0
      %v779 = vsel %vm762, %v759, 0
      %v782 = vsel %vm762, %v760, 0
      %v785 = vsel %vm762, %v761, 0
      %787 = vmatpush.bf16.msra.mxu0 0
      %788 = vmatpush.bf16.msra.mxu0 0
      %789 = vmatpush.bf16.msra.mxu0 0
      %790 = vmatpush.bf16.msra.mxu0 0
      %791 = vmatpush.bf16.msra.mxu0 %v720
      %792 = vmatpush.bf16.msra.mxu0 %v718
      %793 = vmatpush.bf16.msra.mxu0 %v716
      %794 = vmatpush.bf16.msra.mxu0 %v714
      %795 = vmatmul.bf16.gmra.mxu0 %v764
      %v796 = vpop.f32.mrf.mxu0
      %v797 = vadd.f32 0.0, %v796
      %v798 = vpop.f32.mrf.mxu0
      %v799 = vadd.f32 0.0, %v798
      %800 = vmatmul.bf16.gmra.mxu0 %v767
      %v801 = vpop.f32.mrf.mxu0
      %v802 = vadd.f32 0.0, %v801
      %v803 = vpop.f32.mrf.mxu0
      %v804 = vadd.f32 0.0, %v803
      %805 = vmatmul.bf16.gmra.mxu0 %v770
      %v806 = vpop.f32.mrf.mxu0
      %v807 = vadd.f32 0.0, %v806
      %v808 = vpop.f32.mrf.mxu0
      %v809 = vadd.f32 0.0, %v808
      %810 = vmatmul.bf16.gmra.mxu0 %v773
      %v811 = vpop.f32.mrf.mxu0
      %v812 = vadd.f32 0.0, %v811
      %v813 = vpop.f32.mrf.mxu0
      %v814 = vadd.f32 0.0, %v813
      %815 = vmatmul.bf16.gmra.mxu0 %v776
      %v816 = vpop.f32.mrf.mxu0
      %v817 = vadd.f32 0.0, %v816
      %v818 = vpop.f32.mrf.mxu0
      %v819 = vadd.f32 0.0, %v818
      %820 = vmatmul.bf16.gmra.mxu0 %v779
      %v821 = vpop.f32.mrf.mxu0
      %v822 = vadd.f32 0.0, %v821
      %v823 = vpop.f32.mrf.mxu0
      %v824 = vadd.f32 0.0, %v823
      %825 = vmatmul.bf16.gmra.mxu0 %v782
      %v826 = vpop.f32.mrf.mxu0
      %v827 = vadd.f32 0.0, %v826
      %v828 = vpop.f32.mrf.mxu0
      %v829 = vadd.f32 0.0, %v828
      %830 = vmatmul.bf16.gmra.mxu0 %v785
      %v831 = vpop.f32.mrf.mxu0
      %v832 = vadd.f32 0.0, %v831
      %v833 = vpop.f32.mrf.mxu0
      %v834 = vadd.f32 0.0, %v833
      %835 = vdwg.mxu0
      %836 = vmatpush.bf16.msra.mxu0 0
      %837 = vmatpush.bf16.msra.mxu0 0
      %838 = vmatpush.bf16.msra.mxu0 0
      %839 = vmatpush.bf16.msra.mxu0 0
      %840 = vmatpush.bf16.msra.mxu0 %v721
      %841 = vmatpush.bf16.msra.mxu0 %v719
      %842 = vmatpush.bf16.msra.mxu0 %v717
      %843 = vmatpush.bf16.msra.mxu0 %v715
      %844 = vmatmul.bf16.gmra.mxu0 %v764
      %v845 = vpop.f32.mrf.mxu0
      %v846 = vadd.f32 0.0, %v845
      %v847 = vpop.f32.mrf.mxu0
      %v848 = vadd.f32 0.0, %v847
      %849 = vmatmul.bf16.gmra.mxu0 %v767
      %v850 = vpop.f32.mrf.mxu0
      %v851 = vadd.f32 0.0, %v850
      %v852 = vpop.f32.mrf.mxu0
      %v853 = vadd.f32 0.0, %v852
      %854 = vmatmul.bf16.gmra.mxu0 %v770
      %v855 = vpop.f32.mrf.mxu0
      %v856 = vadd.f32 0.0, %v855
      %v857 = vpop.f32.mrf.mxu0
      %v858 = vadd.f32 0.0, %v857
      %859 = vmatmul.bf16.gmra.mxu0 %v773
      %v860 = vpop.f32.mrf.mxu0
      %v861 = vadd.f32 0.0, %v860
      %v862 = vpop.f32.mrf.mxu0
      %v863 = vadd.f32 0.0, %v862
      %864 = vmatmul.bf16.gmra.mxu0 %v776
      %v865 = vpop.f32.mrf.mxu0
      %v866 = vadd.f32 0.0, %v865
      %v867 = vpop.f32.mrf.mxu0
      %v868 = vadd.f32 0.0, %v867
      %869 = vmatmul.bf16.gmra.mxu0 %v779
      %v870 = vpop.f32.mrf.mxu0
      %v871 = vadd.f32 0.0, %v870
      %v872 = vpop.f32.mrf.mxu0
      %v873 = vadd.f32 0.0, %v872
      %874 = vmatmul.bf16.gmra.mxu0 %v782
      %v875 = vpop.f32.mrf.mxu0
      %v876 = vadd.f32 0.0, %v875
      %v877 = vpop.f32.mrf.mxu0
      %v878 = vadd.f32 0.0, %v877
      %879 = vmatmul.bf16.gmra.mxu0 %v785
      %v880 = vpop.f32.mrf.mxu0
      %v881 = vadd.f32 0.0, %v880
      %v882 = vpop.f32.mrf.mxu0
      %v883 = vadd.f32 0.0, %v882
      %884 = vdwg.mxu0
      %v885 = vld [vmem:[%s260] sm:$0xff]
      %v886 = vld [vmem:[%s260 + $0x8] sm:$0xff]
      %v887 = vld [vmem:[%s260 + $0x10] sm:$0xff]
      %v888 = vld [vmem:[%s260 + $0x18] sm:$0xff]
      %v889 = vld [vmem:[%s260 + $0x20] sm:$0xff]
      %v890 = vld [vmem:[%s260 + $0x28] sm:$0xff]
      %v891 = vld [vmem:[%s260 + $0x30] sm:$0xff]
      %v892 = vld [vmem:[%s260 + $0x38] sm:$0xff]
      %v893 = vld [vmem:[%s260 + $0x40] sm:$0xff]
      %v894 = vld [vmem:[%s260 + $0x48] sm:$0xff]
      %v895 = vld [vmem:[%s260 + $0x50] sm:$0xff]
      %v896 = vld [vmem:[%s260 + $0x58] sm:$0xff]
      %v897 = vld [vmem:[%s260 + $0x60] sm:$0xff]
      %v898 = vld [vmem:[%s260 + $0x68] sm:$0xff]
      %v899 = vld [vmem:[%s260 + $0x70] sm:$0xff]
      %v900 = vld [vmem:[%s260 + $0x78] sm:$0xff]
      %v901 = vadd.f32 %v797, %v846
      %902 = vadd.xlane.f32.xlu0 %v901
      %v903 = vpop.xlane.xlu0 %902
      %v904 = vadd.f32 %v799, %v848
      %905 = vadd.xlane.f32.xlu0 %v904
      %v906 = vpop.xlane.xlu0 %905
      %v907 = vadd.f32 %v802, %v851
      %908 = vadd.xlane.f32.xlu0 %v907
      %v909 = vpop.xlane.xlu0 %908
      %v910 = vadd.f32 %v804, %v853
      %911 = vadd.xlane.f32.xlu0 %v910
      %v912 = vpop.xlane.xlu0 %911
      %v913 = vadd.f32 %v807, %v856
      %914 = vadd.xlane.f32.xlu0 %v913
      %v915 = vpop.xlane.xlu0 %914
      %v916 = vadd.f32 %v809, %v858
      %917 = vadd.xlane.f32.xlu0 %v916
      %v918 = vpop.xlane.xlu0 %917
      %v919 = vadd.f32 %v812, %v861
      %920 = vadd.xlane.f32.xlu0 %v919
      %v921 = vpop.xlane.xlu0 %920
      %v922 = vadd.f32 %v814, %v863
      %923 = vadd.xlane.f32.xlu0 %v922
      %v924 = vpop.xlane.xlu0 %923
      %v925 = vadd.f32 %v817, %v866
      %926 = vadd.xlane.f32.xlu0 %v925
      %v927 = vpop.xlane.xlu0 %926
      %v928 = vadd.f32 %v819, %v868
      %929 = vadd.xlane.f32.xlu0 %v928
      %v930 = vpop.xlane.xlu0 %929
      %v931 = vadd.f32 %v822, %v871
      %932 = vadd.xlane.f32.xlu0 %v931
      %v933 = vpop.xlane.xlu0 %932
      %v934 = vadd.f32 %v824, %v873
      %935 = vadd.xlane.f32.xlu0 %v934
      %v936 = vpop.xlane.xlu0 %935
      %v937 = vadd.f32 %v827, %v876
      %938 = vadd.xlane.f32.xlu0 %v937
      %v939 = vpop.xlane.xlu0 %938
      %v940 = vadd.f32 %v829, %v878
      %941 = vadd.xlane.f32.xlu0 %v940
      %v942 = vpop.xlane.xlu0 %941
      %v943 = vadd.f32 %v832, %v881
      %944 = vadd.xlane.f32.xlu0 %v943
      %v945 = vpop.xlane.xlu0 %944
      %v946 = vadd.f32 %v834, %v883
      %947 = vadd.xlane.f32.xlu0 %v946
      %v948 = vpop.xlane.xlu0 %947
      %v949 = vadd.f32 %v885, %v903
      %v950 = vadd.f32 %v886, %v906
      %v951 = vadd.f32 %v887, %v909
      %v952 = vadd.f32 %v888, %v912
      %v953 = vadd.f32 %v889, %v915
      %v954 = vadd.f32 %v890, %v918
      %v955 = vadd.f32 %v891, %v921
      %v956 = vadd.f32 %v892, %v924
      %v957 = vadd.f32 %v893, %v927
      %v958 = vadd.f32 %v894, %v930
      %v959 = vadd.f32 %v895, %v933
      %v960 = vadd.f32 %v896, %v936
      %v961 = vadd.f32 %v897, %v939
      %v962 = vadd.f32 %v898, %v942
      %v963 = vadd.f32 %v899, %v945
      %v964 = vadd.f32 %v900, %v948
      %vm965 = vcmask 7168
      %966 = vst.msk [vmem:[%s260] sm:$0xff] %vm965, %v949
      %967 = vst.msk [vmem:[%s260 + $0x8] sm:$0xff] %vm965, %v950
      %968 = vst.msk [vmem:[%s260 + $0x10] sm:$0xff] %vm965, %v951
      %969 = vst.msk [vmem:[%s260 + $0x18] sm:$0xff] %vm965, %v952
      %970 = vst.msk [vmem:[%s260 + $0x20] sm:$0xff] %vm965, %v953
      %971 = vst.msk [vmem:[%s260 + $0x28] sm:$0xff] %vm965, %v954
      %972 = vst.msk [vmem:[%s260 + $0x30] sm:$0xff] %vm965, %v955
      %973 = vst.msk [vmem:[%s260 + $0x38] sm:$0xff] %vm965, %v956
      %974 = vst.msk [vmem:[%s260 + $0x40] sm:$0xff] %vm965, %v957
      %975 = vst.msk [vmem:[%s260 + $0x48] sm:$0xff] %vm965, %v958
      %976 = vst.msk [vmem:[%s260 + $0x50] sm:$0xff] %vm965, %v959
      %977 = vst.msk [vmem:[%s260 + $0x58] sm:$0xff] %vm965, %v960
      %978 = vst.msk [vmem:[%s260 + $0x60] sm:$0xff] %vm965, %v961
      %979 = vst.msk [vmem:[%s260 + $0x68] sm:$0xff] %vm965, %v962
      %980 = vst.msk [vmem:[%s260 + $0x70] sm:$0xff] %vm965, %v963
      %981 = vst.msk [vmem:[%s260 + $0x78] sm:$0xff] %vm965, %v964
      %v982 = vld [vmem:[%s265] sm:$0xff]
      %v983 = vld [vmem:[%s265 + $0x8] sm:$0xff]
      %v984 = vld [vmem:[%s265 + $0x10] sm:$0xff]
      %v985 = vld [vmem:[%s265 + $0x18] sm:$0xff]
      %v986 = vld [vmem:[%s265 + $0x20] sm:$0xff]
      %v987 = vld [vmem:[%s265 + $0x28] sm:$0xff]
      %v988 = vld [vmem:[%s265 + $0x30] sm:$0xff]
      %v989 = vld [vmem:[%s265 + $0x38] sm:$0xff]
      %v990 = vld [vmem:[%s265 + $0x40] sm:$0xff]
      %v991 = vld [vmem:[%s265 + $0x48] sm:$0xff]
      %v992 = vld [vmem:[%s265 + $0x50] sm:$0xff]
      %v993 = vld [vmem:[%s265 + $0x58] sm:$0xff]
      %v994 = vld [vmem:[%s265 + $0x60] sm:$0xff]
      %v995 = vld [vmem:[%s265 + $0x68] sm:$0xff]
      %v996 = vld [vmem:[%s265 + $0x70] sm:$0xff]
      %v997 = vld [vmem:[%s265 + $0x78] sm:$0xff]
      %v998 = vmul.f32 %v797, %v797
      %v999 = vmul.f32 %v846, %v846
      %v1000 = vmul.f32 %v799, %v799
      %v1001 = vmul.f32 %v848, %v848
      %v1002 = vmul.f32 %v802, %v802
      %v1003 = vmul.f32 %v851, %v851
      %v1004 = vmul.f32 %v804, %v804
      %v1005 = vmul.f32 %v853, %v853
      %v1006 = vmul.f32 %v807, %v807
      %v1007 = vmul.f32 %v856, %v856
      %v1008 = vmul.f32 %v809, %v809
      %v1009 = vmul.f32 %v858, %v858
      %v1010 = vmul.f32 %v812, %v812
      %v1011 = vmul.f32 %v861, %v861
      %v1012 = vmul.f32 %v814, %v814
      %v1013 = vmul.f32 %v863, %v863
      %v1014 = vmul.f32 %v817, %v817
      %v1015 = vmul.f32 %v866, %v866
      %v1016 = vmul.f32 %v819, %v819
      %v1017 = vmul.f32 %v868, %v868
      %v1018 = vmul.f32 %v822, %v822
      %v1019 = vmul.f32 %v871, %v871
      %v1020 = vmul.f32 %v824, %v824
      %v1021 = vmul.f32 %v873, %v873
      %v1022 = vmul.f32 %v827, %v827
      %v1023 = vmul.f32 %v876, %v876
      %v1024 = vmul.f32 %v829, %v829
      %v1025 = vmul.f32 %v878, %v878
      %v1026 = vmul.f32 %v832, %v832
      %v1027 = vmul.f32 %v881, %v881
      %v1028 = vmul.f32 %v834, %v834
      %v1029 = vmul.f32 %v883, %v883
      %v1030 = vadd.f32 %v998, %v999
      %1031 = vadd.xlane.f32.xlu0 %v1030
      %v1032 = vpop.xlane.xlu0 %1031
      %v1033 = vadd.f32 %v1000, %v1001
      %1034 = vadd.xlane.f32.xlu0 %v1033
      %v1035 = vpop.xlane.xlu0 %1034
      %v1036 = vadd.f32 %v1002, %v1003
      %1037 = vadd.xlane.f32.xlu0 %v1036
      %v1038 = vpop.xlane.xlu0 %1037
      %v1039 = vadd.f32 %v1004, %v1005
      %1040 = vadd.xlane.f32.xlu0 %v1039
      %v1041 = vpop.xlane.xlu0 %1040
      %v1042 = vadd.f32 %v1006, %v1007
      %1043 = vadd.xlane.f32.xlu0 %v1042
      %v1044 = vpop.xlane.xlu0 %1043
      %v1045 = vadd.f32 %v1008, %v1009
      %1046 = vadd.xlane.f32.xlu0 %v1045
      %v1047 = vpop.xlane.xlu0 %1046
      %v1048 = vadd.f32 %v1010, %v1011
      %1049 = vadd.xlane.f32.xlu0 %v1048
      %v1050 = vpop.xlane.xlu0 %1049
      %v1051 = vadd.f32 %v1012, %v1013
      %1052 = vadd.xlane.f32.xlu0 %v1051
      %v1053 = vpop.xlane.xlu0 %1052
      %v1054 = vadd.f32 %v1014, %v1015
      %1055 = vadd.xlane.f32.xlu0 %v1054
      %v1056 = vpop.xlane.xlu0 %1055
      %v1057 = vadd.f32 %v1016, %v1017
      %1058 = vadd.xlane.f32.xlu0 %v1057
      %v1059 = vpop.xlane.xlu0 %1058
      %v1060 = vadd.f32 %v1018, %v1019
      %1061 = vadd.xlane.f32.xlu0 %v1060
      %v1062 = vpop.xlane.xlu0 %1061
      %v1063 = vadd.f32 %v1020, %v1021
      %1064 = vadd.xlane.f32.xlu0 %v1063
      %v1065 = vpop.xlane.xlu0 %1064
      %v1066 = vadd.f32 %v1022, %v1023
      %1067 = vadd.xlane.f32.xlu0 %v1066
      %v1068 = vpop.xlane.xlu0 %1067
      %v1069 = vadd.f32 %v1024, %v1025
      %1070 = vadd.xlane.f32.xlu0 %v1069
      %v1071 = vpop.xlane.xlu0 %1070
      %v1072 = vadd.f32 %v1026, %v1027
      %1073 = vadd.xlane.f32.xlu0 %v1072
      %v1074 = vpop.xlane.xlu0 %1073
      %v1075 = vadd.f32 %v1028, %v1029
      %1076 = vadd.xlane.f32.xlu0 %v1075
      %v1077 = vpop.xlane.xlu0 %1076
      %v1078 = vadd.f32 %v982, %v1032
      %v1079 = vadd.f32 %v983, %v1035
      %v1080 = vadd.f32 %v984, %v1038
      %v1081 = vadd.f32 %v985, %v1041
      %v1082 = vadd.f32 %v986, %v1044
      %v1083 = vadd.f32 %v987, %v1047
      %v1084 = vadd.f32 %v988, %v1050
      %v1085 = vadd.f32 %v989, %v1053
      %v1086 = vadd.f32 %v990, %v1056
      %v1087 = vadd.f32 %v991, %v1059
      %v1088 = vadd.f32 %v992, %v1062
      %v1089 = vadd.f32 %v993, %v1065
      %v1090 = vadd.f32 %v994, %v1068
      %v1091 = vadd.f32 %v995, %v1071
      %v1092 = vadd.f32 %v996, %v1074
      %v1093 = vadd.f32 %v997, %v1077
      %1094 = vst.msk [vmem:[%s265] sm:$0xff] %vm965, %v1078
      %1095 = vst.msk [vmem:[%s265 + $0x8] sm:$0xff] %vm965, %v1079
      %1096 = vst.msk [vmem:[%s265 + $0x10] sm:$0xff] %vm965, %v1080
      %1097 = vst.msk [vmem:[%s265 + $0x18] sm:$0xff] %vm965, %v1081
      %1098 = vst.msk [vmem:[%s265 + $0x20] sm:$0xff] %vm965, %v1082
      %1099 = vst.msk [vmem:[%s265 + $0x28] sm:$0xff] %vm965, %v1083
      %1100 = vst.msk [vmem:[%s265 + $0x30] sm:$0xff] %vm965, %v1084
      %1101 = vst.msk [vmem:[%s265 + $0x38] sm:$0xff] %vm965, %v1085
      %1102 = vst.msk [vmem:[%s265 + $0x40] sm:$0xff] %vm965, %v1086
      %1103 = vst.msk [vmem:[%s265 + $0x48] sm:$0xff] %vm965, %v1087
      %1104 = vst.msk [vmem:[%s265 + $0x50] sm:$0xff] %vm965, %v1088
      %1105 = vst.msk [vmem:[%s265 + $0x58] sm:$0xff] %vm965, %v1089
      %1106 = vst.msk [vmem:[%s265 + $0x60] sm:$0xff] %vm965, %v1090
      %1107 = vst.msk [vmem:[%s265 + $0x68] sm:$0xff] %vm965, %v1091
      %1108 = vst.msk [vmem:[%s265 + $0x70] sm:$0xff] %vm965, %v1092
      %1109 = vst.msk [vmem:[%s265 + $0x78] sm:$0xff] %vm965, %v1093
      %p1110 = scmp.lt.s32.totalorder %s21, 1
      %s1111 = scalar_select %p1110, %s21, 1
      %s1112 = smul.addr %s1111, 16
      %s1113 = smul.addr %s1112, 8
      %s1114 = scalar_lea.vmem %s4, %s1113
      %p1115 = scmp.lt.s32.totalorder %s21, 1
      %s1116 = scalar_select %p1115, %s21, 1
      %s1117 = smul.addr %s1116, 16
      %s1118 = smul.addr %s1117, 8
      %s1119 = scalar_lea.vmem %s5, %s1118
      // Predicated region
      $region41: #{pixel_discriminator_forward.2} parent=35 // pred_check
        %p1120 = pneg %p138
      $region42: #{pixel_discriminator_forward.2} parent=35 // pred_check_branch
        %1122 = sbr.rel (%p1120) target = $region44
      $region43: #{pixel_discriminator_forward.2} parent=35 // pred_region
        _
      $region44: #{pixel_discriminator_forward.2} parent=35 // pred_fallthru
        _
      // Predicated region
      $region45: #{pixel_discriminator_forward.2} parent=35 // pred_check
        %p1123 = pneg %p164
      $region46: #{pixel_discriminator_forward.2} parent=35 // pred_check_branch
        %1125 = sbr.rel (%p1123) target = $region48
      $region47: #{pixel_discriminator_forward.2} parent=35 // pred_region
        _
      $region48: #{pixel_discriminator_forward.2} parent=35 // pred_fallthru
        _
    $region36: #{pixel_discriminator_forward.2} parent=5 // pred_fallthru
      _
    %p1126 = scmp.le.s32.totalorder 2, %s12
    // Predicated region
    $region49: #{pixel_discriminator_forward.2} parent=5 // pred_check
      %p1127 = pneg %p1126
    $region50: #{pixel_discriminator_forward.2} parent=5 // pred_check_branch
      %1129 = sbr.rel (%p1127) target = $region52
    $region51: #{pixel_discriminator_forward.2} parent=5 // pred_region
      %s1130 = ssub.s32 %s12, 2
      // Predicated region
      $region53: #{pixel_discriminator_forward.2} parent=51 // pred_check
        %p1131 = pneg %p144
      $region54: #{pixel_discriminator_forward.2} parent=51 // pred_check_branch
        %1133 = sbr.rel (%p1131) target = $region56
      $region55: #{pixel_discriminator_forward.2} parent=51 // pred_region
        %p1134 = scmp.lt.s32.totalorder %s23, 1
        %s1135 = scalar_select %p1134, %s23, 1
        %s1136 = smul.addr %s1135, 16
        %s1137 = smul.addr %s1136, 8
        %s1138 = scalar_lea.vmem %s4, %s1137
      $region56: #{pixel_discriminator_forward.2} parent=51 // pred_fallthru
        _
      // Predicated region
      $region57: #{pixel_discriminator_forward.2} parent=51 // pred_check
        %p1139 = pneg %p170
      $region58: #{pixel_discriminator_forward.2} parent=51 // pred_check_branch
        %1141 = sbr.rel (%p1139) target = $region60
      $region59: #{pixel_discriminator_forward.2} parent=51 // pred_region
        %p1142 = scmp.lt.s32.totalorder %s23, 1
        %s1143 = scalar_select %p1142, %s23, 1
        %s1144 = smul.addr %s1143, 16
        %s1145 = smul.addr %s1144, 8
        %s1146 = scalar_lea.vmem %s5, %s1145
      $region60: #{pixel_discriminator_forward.2} parent=51 // pred_fallthru
        _
    $region52: #{pixel_discriminator_forward.2} parent=5 // pred_fallthru
      _
  $region6: #{pixel_discriminator_forward.2} parent=0 // loop_footer
    %s16 = sadd.s32 1, %s12
  $region7: #{pixel_discriminator_forward.2} parent=0 // loop_footer_branch
    %11 = sbr.rel target = $region3
  $region8: #{pixel_discriminator_forward.2} parent=0 // loop_exit
    _

// kernel: pixel_discriminator_forward.3
$region0: #{pixel_discriminator_forward.3}
  #allocation0 [shape = 'u32[]', space=smem, size = 0x4, offset = 0x4, fixed_abs, tag = 'smem constant byte address 0x4 - core index']
  #allocation1 [shape = 'u32[72,128]{1,0:T(1,128)}', space=vmem, size = 0x9000, scoped, tag = 'internal scratch']
  %s0 = inlined_call_operand.vmem [shape: f32[2,4,256], index: 0, kind: input, shape index: {}]
  %s1 = inlined_call_operand.vmem [shape: f32[64,4], index: 1, kind: input, shape index: {}]
  %s2 = inlined_call_operand.vmem [shape: f32[64,1], index: 2, kind: input, shape index: {}]
  %s3 = inlined_call_operand.vmem [shape: bf16[128,64], index: 3, kind: input, shape index: {}]
  %s4 = inlined_call_operand.vmem [shape: f32[128,1], index: 4, kind: input, shape index: {}]
  %s5 = inlined_call_operand.vmem [shape: f32[128,1], index: 5, kind: input, shape index: {}]
  %s6 = inlined_call_operand.vmem [shape: bf16[8,128], index: 6, kind: input, shape index: {}]
  %s7 = inlined_call_operand.vmem [shape: f32[2,1,256], index: 7, kind: output, shape index: {}]
  %s8 = sld [smem:[#allocation0]]
  $region61: #{pixel_discriminator_forward.3} parent=0
    _
  %s10 = ssub.s32 1, %s8
  %s11 = scalar_select 0, %s10, %s8
  loop: start=0, step=1, limit=4
  $region2: #{pixel_discriminator_forward.3} parent=0 // loop_pre_header
    _
  $region3: #{pixel_discriminator_forward.3} parent=0 // loop_header
    %s13 = sphi 0, %s17
    %p14 = scmp.ge.s32.totalorder %s13, 4
    %s20 = sphi 0, %s32
    %s21 = sphi 0, %s28
    %s22 = sphi 0, %s20
    %s23 = sphi 0, %s21
    %s24 = sphi 0, %s22
    %s25 = sphi 0, %s23
    %s37 = sphi 0, %s39
    %s40 = sphi 0, %s37
    %s41 = sphi 0, %s40
    %s57 = sphi 0, %s41
    %s61 = sphi 0, %s61
    %s63 = sphi 0, %s61
    %s64 = sphi 0, %s63
    %s78 = sphi 0, %s64
    %s82 = sphi 0, %s82
    %s84 = sphi 0, %s82
    %s85 = sphi 0, %s84
    %s99 = sphi 0, %s85
    %s103 = sphi 0, %s103
    %s105 = sphi 0, %s103
    %s106 = sphi 0, %s105
    %s120 = sphi 0, %s106
    %s124 = sphi 0, %s124
    %s126 = sphi 0, %s124
    %s127 = sphi 0, %s126
    %s141 = sphi 0, %s127
    %s145 = sphi 0, %s145
    %s147 = sphi 0, %s145
    %s148 = sphi 0, %s147
    %s162 = sphi 0, %s148
    %s166 = sphi 0, %s166
    %s168 = sphi 0, %s166
    %s169 = sphi 0, %s168
    %s183 = sphi 0, %s169
    %s191 = sphi 0, %s193
    %s194 = sphi 0, %s191
    %s195 = sphi 0, %s194
    %s211 = sphi 0, %s195
  $region4: #{pixel_discriminator_forward.3} parent=0 // loop_header_branch
    %16 = sbr.rel (%p14) target = $region8
  $region5: #{pixel_discriminator_forward.3} parent=0 // loop_body
    %s18 = ssub.s32 %s13, 1
    %s19 = ssub.s32 %s13, 2
    %s26 = sadd.s32 1, %s21
    %p27 = scmp.ge.s32.totalorder %s26, 1
    %s28 = scalar_select %p27, 0, %s26
    %s29 = sadd.s32 1, %s20
    %s30 = scalar_select %p27, %s29, %s20
    %p31 = scmp.ge.s32.totalorder %s30, 2
    %s32 = scalar_select %p31, 0, %s30
    %s33 = ssub.s32 %s20, %s32
    %s34 = ssub.s32 %s21, %s28
    %s35 = sor.u32 %s33, %s34
    %p36 = scmp.eq.s32.totalorder %s35, 0
    %s38 = sadd.s32 %s37, 1
    %s39 = scalar_select %p36, %s37, %s38
    %p42 = pneg %p36
    %p43 = scmp.eq.s32.totalorder %s13, 1
    %p44 = por %p42, %p43
    %p45 = scmp.ne.s32.totalorder %s37, %s40
    %p46 = scmp.eq.s32.totalorder %s13, 0
    %p47 = por %p45, %p46
    %p48 = scmp.ne.s32.totalorder %s37, %s40
    %p49 = scmp.eq.s32.totalorder %s18, 1
    %p50 = por %p48, %p49
    %p51 = scmp.ne.s32.totalorder %s40, %s41
    %p52 = scmp.eq.s32.totalorder %s18, 0
    %p53 = por %p51, %p52
    %p54 = scmp.ne.s32.totalorder %s40, %s41
    %p55 = scmp.eq.s32.totalorder %s19, 1
    %p56 = por %p54, %p55
    %p58 = scmp.ne.s32.totalorder %s41, %s57
    %p59 = scmp.eq.s32.totalorder %s19, 0
    %p60 = por %p58, %p59
    %s62 = sadd.s32 %s61, 1
    %p65 = scmp.eq.s32.totalorder %s13, 1
    %p66 = scmp.ne.s32.totalorder %s61, %s63
    %p67 = scmp.eq.s32.totalorder %s13, 0
    %p68 = por %p66, %p67
    %p69 = scmp.ne.s32.totalorder %s61, %s63
    %p70 = scmp.eq.s32.totalorder %s18, 1
    %p71 = por %p69, %p70
    %p72 = scmp.ne.s32.totalorder %s63, %s64
    %p73 = scmp.eq.s32.totalorder %s18, 0
    %p74 = por %p72, %p73
    %p75 = scmp.ne.s32.totalorder %s63, %s64
    %p76 = scmp.eq.s32.totalorder %s19, 1
    %p77 = por %p75, %p76
    %p79 = scmp.ne.s32.totalorder %s64, %s78
    %p80 = scmp.eq.s32.totalorder %s19, 0
    %p81 = por %p79, %p80
    %s83 = sadd.s32 %s82, 1
    %p86 = scmp.eq.s32.totalorder %s13, 1
    %p87 = scmp.ne.s32.totalorder %s82, %s84
    %p88 = scmp.eq.s32.totalorder %s13, 0
    %p89 = por %p87, %p88
    %p90 = scmp.ne.s32.totalorder %s82, %s84
    %p91 = scmp.eq.s32.totalorder %s18, 1
    %p92 = por %p90, %p91
    %p93 = scmp.ne.s32.totalorder %s84, %s85
    %p94 = scmp.eq.s32.totalorder %s18, 0
    %p95 = por %p93, %p94
    %p96 = scmp.ne.s32.totalorder %s84, %s85
    %p97 = scmp.eq.s32.totalorder %s19, 1
    %p98 = por %p96, %p97
    %p100 = scmp.ne.s32.totalorder %s85, %s99
    %p101 = scmp.eq.s32.totalorder %s19, 0
    %p102 = por %p100, %p101
    %s104 = sadd.s32 %s103, 1
    %p107 = scmp.eq.s32.totalorder %s13, 1
    %p108 = scmp.ne.s32.totalorder %s103, %s105
    %p109 = scmp.eq.s32.totalorder %s13, 0
    %p110 = por %p108, %p109
    %p111 = scmp.ne.s32.totalorder %s103, %s105
    %p112 = scmp.eq.s32.totalorder %s18, 1
    %p113 = por %p111, %p112
    %p114 = scmp.ne.s32.totalorder %s105, %s106
    %p115 = scmp.eq.s32.totalorder %s18, 0
    %p116 = por %p114, %p115
    %p117 = scmp.ne.s32.totalorder %s105, %s106
    %p118 = scmp.eq.s32.totalorder %s19, 1
    %p119 = por %p117, %p118
    %p121 = scmp.ne.s32.totalorder %s106, %s120
    %p122 = scmp.eq.s32.totalorder %s19, 0
    %p123 = por %p121, %p122
    %s125 = sadd.s32 %s124, 1
    %p128 = scmp.eq.s32.totalorder %s13, 1
    %p129 = scmp.ne.s32.totalorder %s124, %s126
    %p130 = scmp.eq.s32.totalorder %s13, 0
    %p131 = por %p129, %p130
    %p132 = scmp.ne.s32.totalorder %s124, %s126
    %p133 = scmp.eq.s32.totalorder %s18, 1
    %p134 = por %p132, %p133
    %p135 = scmp.ne.s32.totalorder %s126, %s127
    %p136 = scmp.eq.s32.totalorder %s18, 0
    %p137 = por %p135, %p136
    %p138 = scmp.ne.s32.totalorder %s126, %s127
    %p139 = scmp.eq.s32.totalorder %s19, 1
    %p140 = por %p138, %p139
    %p142 = scmp.ne.s32.totalorder %s127, %s141
    %p143 = scmp.eq.s32.totalorder %s19, 0
    %p144 = por %p142, %p143
    %s146 = sadd.s32 %s145, 1
    %p149 = scmp.eq.s32.totalorder %s13, 1
    %p150 = scmp.ne.s32.totalorder %s145, %s147
    %p151 = scmp.eq.s32.totalorder %s13, 0
    %p152 = por %p150, %p151
    %p153 = scmp.ne.s32.totalorder %s145, %s147
    %p154 = scmp.eq.s32.totalorder %s18, 1
    %p155 = por %p153, %p154
    %p156 = scmp.ne.s32.totalorder %s147, %s148
    %p157 = scmp.eq.s32.totalorder %s18, 0
    %p158 = por %p156, %p157
    %p159 = scmp.ne.s32.totalorder %s147, %s148
    %p160 = scmp.eq.s32.totalorder %s19, 1
    %p161 = por %p159, %p160
    %p163 = scmp.ne.s32.totalorder %s148, %s162
    %p164 = scmp.eq.s32.totalorder %s19, 0
    %p165 = por %p163, %p164
    %s167 = sadd.s32 %s166, 1
    %p170 = scmp.eq.s32.totalorder %s13, 1
    %p171 = scmp.ne.s32.totalorder %s166, %s168
    %p172 = scmp.eq.s32.totalorder %s13, 0
    %p173 = por %p171, %p172
    %p174 = scmp.ne.s32.totalorder %s166, %s168
    %p175 = scmp.eq.s32.totalorder %s18, 1
    %p176 = por %p174, %p175
    %p177 = scmp.ne.s32.totalorder %s168, %s169
    %p178 = scmp.eq.s32.totalorder %s18, 0
    %p179 = por %p177, %p178
    %p180 = scmp.ne.s32.totalorder %s168, %s169
    %p181 = scmp.eq.s32.totalorder %s19, 1
    %p182 = por %p180, %p181
    %p184 = scmp.ne.s32.totalorder %s169, %s183
    %p185 = scmp.eq.s32.totalorder %s19, 0
    %p186 = por %p184, %p185
    %s187 = ssub.s32 %s20, %s32
    %s188 = ssub.s32 %s21, %s28
    %s189 = sor.u32 %s187, %s188
    %p190 = scmp.eq.s32.totalorder %s189, 0
    %s192 = sadd.s32 %s191, 1
    %s193 = scalar_select %p190, %s191, %s192
    %p196 = pneg %p190
    %p197 = scmp.eq.s32.totalorder %s13, 1
    %p198 = por %p196, %p197
    %p199 = scmp.ne.s32.totalorder %s191, %s194
    %p200 = scmp.eq.s32.totalorder %s13, 0
    %p201 = por %p199, %p200
    %p202 = scmp.ne.s32.totalorder %s191, %s194
    %p203 = scmp.eq.s32.totalorder %s18, 1
    %p204 = por %p202, %p203
    %p205 = scmp.ne.s32.totalorder %s194, %s195
    %p206 = scmp.eq.s32.totalorder %s18, 0
    %p207 = por %p205, %p206
    %p208 = scmp.ne.s32.totalorder %s194, %s195
    %p209 = scmp.eq.s32.totalorder %s19, 1
    %p210 = por %p208, %p209
    %p212 = scmp.ne.s32.totalorder %s195, %s211
    %p213 = scmp.eq.s32.totalorder %s19, 0
    %p214 = por %p212, %p213
    %p215 = scmp.le.s32.totalorder 1, %s13
    %p216 = scmp.lt.s32.totalorder %s13, 3
    %p217 = pnand %p215, %p216
    %p218 = pneg %p217
    // Predicated region
    $region9: #{pixel_discriminator_forward.3} parent=5 // pred_check
      _
    $region10: #{pixel_discriminator_forward.3} parent=5 // pred_check_branch
      %220 = sbr.rel (%p217) target = $region12
    $region11: #{pixel_discriminator_forward.3} parent=5 // pred_region
      %s221 = ssub.s32 %s13, 1
      // Predicated region
      $region13: #{pixel_discriminator_forward.3} parent=11 // pred_check
        %p222 = pneg %p74
      $region14: #{pixel_discriminator_forward.3} parent=11 // pred_check_branch
        %224 = sbr.rel (%p222) target = $region16
      $region15: #{pixel_discriminator_forward.3} parent=11 // pred_region
        _
      $region16: #{pixel_discriminator_forward.3} parent=11 // pred_fallthru
        _
      // Predicated region
      $region17: #{pixel_discriminator_forward.3} parent=11 // pred_check
        %p225 = pneg %p95
      $region18: #{pixel_discriminator_forward.3} parent=11 // pred_check_branch
        %227 = sbr.rel (%p225) target = $region20
      $region19: #{pixel_discriminator_forward.3} parent=11 // pred_region
        _
      $region20: #{pixel_discriminator_forward.3} parent=11 // pred_fallthru
        _
      // Predicated region
      $region21: #{pixel_discriminator_forward.3} parent=11 // pred_check
        %p228 = pneg %p116
      $region22: #{pixel_discriminator_forward.3} parent=11 // pred_check_branch
        %230 = sbr.rel (%p228) target = $region24
      $region23: #{pixel_discriminator_forward.3} parent=11 // pred_region
        _
      $region24: #{pixel_discriminator_forward.3} parent=11 // pred_fallthru
        _
      // Predicated region
      $region25: #{pixel_discriminator_forward.3} parent=11 // pred_check
        %p231 = pneg %p137
      $region26: #{pixel_discriminator_forward.3} parent=11 // pred_check_branch
        %233 = sbr.rel (%p231) target = $region28
      $region27: #{pixel_discriminator_forward.3} parent=11 // pred_region
        _
      $region28: #{pixel_discriminator_forward.3} parent=11 // pred_fallthru
        _
      // Predicated region
      $region29: #{pixel_discriminator_forward.3} parent=11 // pred_check
        %p234 = pneg %p158
      $region30: #{pixel_discriminator_forward.3} parent=11 // pred_check_branch
        %236 = sbr.rel (%p234) target = $region32
      $region31: #{pixel_discriminator_forward.3} parent=11 // pred_region
        _
      $region32: #{pixel_discriminator_forward.3} parent=11 // pred_fallthru
        _
      // Predicated region
      $region33: #{pixel_discriminator_forward.3} parent=11 // pred_check
        %p237 = pneg %p179
      $region34: #{pixel_discriminator_forward.3} parent=11 // pred_check_branch
        %239 = sbr.rel (%p237) target = $region36
      $region35: #{pixel_discriminator_forward.3} parent=11 // pred_region
        _
      $region36: #{pixel_discriminator_forward.3} parent=11 // pred_fallthru
        _
    $region12: #{pixel_discriminator_forward.3} parent=5 // pred_fallthru
      _
    %p240 = scmp.lt.s32.totalorder %s13, 2
    // Predicated region
    $region37: #{pixel_discriminator_forward.3} parent=5 // pred_check
      %p241 = pneg %p240
    $region38: #{pixel_discriminator_forward.3} parent=5 // pred_check_branch
      %243 = sbr.rel (%p241) target = $region40
    $region39: #{pixel_discriminator_forward.3} parent=5 // pred_region
      // Predicated region
      $region41: #{pixel_discriminator_forward.3} parent=39 // pred_check
        %p244 = pneg %p47
      $region42: #{pixel_discriminator_forward.3} parent=39 // pred_check_branch
        %246 = sbr.rel (%p244) target = $region44
      $region43: #{pixel_discriminator_forward.3} parent=39 // pred_region
        %s247 = smul.u32 2, %s21
        %p248 = scmp.lt.s32.totalorder %s20, 1
        %s249 = scalar_select %p248, %s20, 1
        %p250 = scmp.lt.s32.totalorder %s247, 1
        %s251 = scalar_select %p250, %s247, 1
        %s252 = smul.addr %s249, 2
        %s253 = sadd.s32 %s251, %s252
        %s254 = smul.addr %s253, 4
        %s255 = scalar_lea.vmem %s0, %s254
        %s256 = smul.u32 2, %s21
      $region44: #{pixel_discriminator_forward.3} parent=39 // pred_fallthru
        _
    $region40: #{pixel_discriminator_forward.3} parent=5 // pred_fallthru
      _
    %p257 = scmp.le.s32.totalorder 1, %s13
    %p258 = scmp.lt.s32.totalorder %s13, 3
    %p259 = pnand %p257, %p258
    %p260 = pneg %p259
    // Predicated region
    $region45: #{pixel_discriminator_forward.3} parent=5 // pred_check
      _
    $region46: #{pixel_discriminator_forward.3} parent=5 // pred_check_branch
      %262 = sbr.rel (%p259) target = $region48
    $region47: #{pixel_discriminator_forward.3} parent=5 // pred_region
      %s263 = ssub.s32 %s13, 1
      %s264 = smul.u32 2, %s23
      %p265 = scmp.lt.s32.totalorder %s22, 1
      %s266 = scalar_select %p265, %s22, 1
      %p267 = scmp.lt.s32.totalorder %s264, 1
      %s268 = scalar_select %p267, %s264, 1
      %s269 = smul.addr %s266, 2
      %s270 = sadd.s32 %s268, %s269
      %s271 = smul.addr %s270, 4
      %s272 = scalar_lea.vmem %s0, %s271
      %p273 = pneg %p53
      %p274 = pneg %p50
      %p275 = pneg %p74
      %p276 = pneg %p71
      %p277 = pneg %p95
      %p278 = pneg %p92
      %p279 = pneg %p116
      %p280 = pneg %p113
      %p281 = pneg %p137
      %p282 = pneg %p134
      %p283 = pneg %p158
      %p284 = pneg %p155
      %p285 = pneg %p179
      %p286 = pneg %p176
      %p287 = pneg %p207
      %p288 = pneg %p204
      %s289 = smul.u32 2, %s23
      %p290 = scmp.lt.s32.totalorder %s22, 1
      %s291 = scalar_select %p290, %s22, 1
      %p292 = scmp.lt.s32.totalorder %s289, 1
      %s293 = scalar_select %p292, %s289, 1
      %s294 = smul.addr %s291, 2
      %s295 = sadd.s32 %s293, %s294
      %s296 = scalar_lea.vmem %s7, %s295
      %s297 = smul.u32 2, %s23
      %p298 = scmp.lt.s32.totalorder %s22, 1
      %s299 = scalar_select %p298, %s22, 1
      %p300 = scmp.lt.s32.totalorder %s297, 1
      %s301 = scalar_select %p300, %s297, 1
      %s302 = smul.addr %s299, 2
      %s303 = sadd.s32 %s301, %s302
      %s304 = smul.addr %s303, 4
      %s305 = scalar_lea.vmem %s0, %s304
      %s306 = smul.u32 2, %s23
      %s307 = smul.u32 2, %s23
      %p308 = scmp.lt.s32.totalorder %s22, 1
      %s309 = scalar_select %p308, %s22, 1
      %p310 = scmp.lt.s32.totalorder %s307, 1
      %s311 = scalar_select %p310, %s307, 1
      %s312 = smul.addr %s309, 2
      %s313 = sadd.s32 %s311, %s312
      %s314 = scalar_lea.vmem %s7, %s313
      %s315 = smul.u32 2, %s23
      %v317 = vld [vmem:[%s305] sm:$0xff]
      %v318 = vld [vmem:[%s1] sm:$0xff]
      %v319 = vld [vmem:[%s1 + $0x8] sm:$0xff]
      %v320 = vld [vmem:[%s1 + $0x10] sm:$0xff]
      %v321 = vld [vmem:[%s1 + $0x18] sm:$0xff]
      %v322 = vld [vmem:[%s1 + $0x20] sm:$0xff]
      %v323 = vld [vmem:[%s1 + $0x28] sm:$0xff]
      %v324 = vld [vmem:[%s1 + $0x30] sm:$0xff]
      %v325 = vld [vmem:[%s1 + $0x38] sm:$0xff]
      %v326 = vld [vmem:[%s2] sm:$0xff]
      %v327 = vld [vmem:[%s2 + $0x8] sm:$0xff]
      %v328 = vld [vmem:[%s2 + $0x10] sm:$0xff]
      %v329 = vld [vmem:[%s2 + $0x18] sm:$0xff]
      %v330 = vld [vmem:[%s2 + $0x20] sm:$0xff]
      %v331 = vld [vmem:[%s2 + $0x28] sm:$0xff]
      %v332 = vld [vmem:[%s2 + $0x30] sm:$0xff]
      %v333 = vld [vmem:[%s2 + $0x38] sm:$0xff]
      %335 = vset.pattern.permute.xlu0 0
      %336 = vperm.xlu0 %335, %v318
      %v337 = vpop.permute.xlu0 %336
      %340 = vset.pattern.permute.xlu0 0
      %341 = vperm.xlu0 %340, %v319
      %v342 = vpop.permute.xlu0 %341
      %345 = vset.pattern.permute.xlu0 0
      %346 = vperm.xlu0 %345, %v320
      %v347 = vpop.permute.xlu0 %346
      %350 = vset.pattern.permute.xlu0 0
      %351 = vperm.xlu0 %350, %v321
      %v352 = vpop.permute.xlu0 %351
      %355 = vset.pattern.permute.xlu0 0
      %356 = vperm.xlu0 %355, %v322
      %v357 = vpop.permute.xlu0 %356
      %360 = vset.pattern.permute.xlu0 0
      %361 = vperm.xlu0 %360, %v323
      %v362 = vpop.permute.xlu0 %361
      %365 = vset.pattern.permute.xlu0 0
      %366 = vperm.xlu0 %365, %v324
      %v367 = vpop.permute.xlu0 %366
      %370 = vset.pattern.permute.xlu0 0
      %371 = vperm.xlu0 %370, %v325
      %v372 = vpop.permute.xlu0 %371
      %v375 = vperm.slane %v317, 0
      %v376 = vperm.slane %v317, 4
      %v379 = vperm.slane %v375, 0
      %v380 = vperm.slane %v376, 0
      %v381 = vmul.f32 %v337, %v379
      %v382 = vmul.f32 %v337, %v380
      %v383 = vmul.f32 %v342, %v379
      %v384 = vmul.f32 %v342, %v380
      %v385 = vmul.f32 %v347, %v379
      %v386 = vmul.f32 %v347, %v380
      %v387 = vmul.f32 %v352, %v379
      %v388 = vmul.f32 %v352, %v380
      %v389 = vmul.f32 %v357, %v379
      %v390 = vmul.f32 %v357, %v380
      %v391 = vmul.f32 %v362, %v379
      %v392 = vmul.f32 %v362, %v380
      %v393 = vmul.f32 %v367, %v379
      %v394 = vmul.f32 %v367, %v380
      %v395 = vmul.f32 %v372, %v379
      %v396 = vmul.f32 %v372, %v380
      %398 = vset.pattern.permute.xlu0 0
      %399 = vperm.xlu0 %398, %v326
      %v400 = vpop.permute.xlu0 %399
      %403 = vset.pattern.permute.xlu0 0
      %404 = vperm.xlu0 %403, %v327
      %v405 = vpop.permute.xlu0 %404
      %408 = vset.pattern.permute.xlu0 0
      %409 = vperm.xlu0 %408, %v328
      %v410 = vpop.permute.xlu0 %409
      %413 = vset.pattern.permute.xlu0 0
      %414 = vperm.xlu0 %413, %v329
      %v415 = vpop.permute.xlu0 %414
      %418 = vset.pattern.permute.xlu0 0
      %419 = vperm.xlu0 %418, %v330
      %v420 = vpop.permute.xlu0 %419
      %423 = vset.pattern.permute.xlu0 0
      %424 = vperm.xlu0 %423, %v331
      %v425 = vpop.permute.xlu0 %424
      %428 = vset.pattern.permute.xlu0 0
      %429 = vperm.xlu0 %428, %v332
      %v430 = vpop.permute.xlu0 %429
      %433 = vset.pattern.permute.xlu0 0
      %434 = vperm.xlu0 %433, %v333
      %v435 = vpop.permute.xlu0 %434
      %v437 = vadd.f32 %v400, %v381
      %v438 = vadd.f32 %v400, %v382
      %v439 = vadd.f32 %v405, %v383
      %v440 = vadd.f32 %v405, %v384
      %v441 = vadd.f32 %v410, %v385
      %v442 = vadd.f32 %v410, %v386
      %v443 = vadd.f32 %v415, %v387
      %v444 = vadd.f32 %v415, %v388
      %v445 = vadd.f32 %v420, %v389
      %v446 = vadd.f32 %v420, %v390
      %v447 = vadd.f32 %v425, %v391
      %v448 = vadd.f32 %v425, %v392
      %v449 = vadd.f32 %v430, %v393
      %v450 = vadd.f32 %v430, %v394
      %v451 = vadd.f32 %v435, %v395
      %v452 = vadd.f32 %v435, %v396
      %453 = vset.pattern.permute.xlu0 1
      %454 = vperm.xlu0 %453, %v318
      %v455 = vpop.permute.xlu0 %454
      %457 = vset.pattern.permute.xlu0 1
      %458 = vperm.xlu0 %457, %v319
      %v459 = vpop.permute.xlu0 %458
      %461 = vset.pattern.permute.xlu0 1
      %462 = vperm.xlu0 %461, %v320
      %v463 = vpop.permute.xlu0 %462
      %465 = vset.pattern.permute.xlu0 1
      %466 = vperm.xlu0 %465, %v321
      %v467 = vpop.permute.xlu0 %466
      %469 = vset.pattern.permute.xlu0 1
      %470 = vperm.xlu0 %469, %v322
      %v471 = vpop.permute.xlu0 %470
      %473 = vset.pattern.permute.xlu0 1
      %474 = vperm.xlu0 %473, %v323
      %v475 = vpop.permute.xlu0 %474
      %477 = vset.pattern.permute.xlu0 1
      %478 = vperm.xlu0 %477, %v324
      %v479 = vpop.permute.xlu0 %478
      %481 = vset.pattern.permute.xlu0 1
      %482 = vperm.xlu0 %481, %v325
      %v483 = vpop.permute.xlu0 %482
      %v485 = vperm.slane %v317, 1
      %v486 = vperm.slane %v317, 5
      %v489 = vperm.slane %v485, 1
      %v490 = vperm.slane %v486, 1
      %v491 = vmul.f32 %v455, %v489
      %v492 = vmul.f32 %v455, %v490
      %v493 = vmul.f32 %v459, %v489
      %v494 = vmul.f32 %v459, %v490
      %v495 = vmul.f32 %v463, %v489
      %v496 = vmul.f32 %v463, %v490
      %v497 = vmul.f32 %v467, %v489
      %v498 = vmul.f32 %v467, %v490
      %v499 = vmul.f32 %v471, %v489
      %v500 = vmul.f32 %v471, %v490
      %v501 = vmul.f32 %v475, %v489
      %v502 = vmul.f32 %v475, %v490
      %v503 = vmul.f32 %v479, %v489
      %v504 = vmul.f32 %v479, %v490
      %v505 = vmul.f32 %v483, %v489
      %v506 = vmul.f32 %v483, %v490
      %v507 = vadd.f32 %v437, %v491
      %v508 = vadd.f32 %v438, %v492
      %v509 = vadd.f32 %v439, %v493
      %v510 = vadd.f32 %v440, %v494
      %v511 = vadd.f32 %v441, %v495
      %v512 = vadd.f32 %v442, %v496
      %v513 = vadd.f32 %v443, %v497
      %v514 = vadd.f32 %v444, %v498
      %v515 = vadd.f32 %v445, %v499
      %v516 = vadd.f32 %v446, %v500
      %v517 = vadd.f32 %v447, %v501
      %v518 = vadd.f32 %v448, %v502
      %v519 = vadd.f32 %v449, %v503
      %v520 = vadd.f32 %v450, %v504
      %v521 = vadd.f32 %v451, %v505
      %v522 = vadd.f32 %v452, %v506
      %523 = vset.pattern.permute.xlu0 2
      %524 = vperm.xlu0 %523, %v318
      %v525 = vpop.permute.xlu0 %524
      %527 = vset.pattern.permute.xlu0 2
      %528 = vperm.xlu0 %527, %v319
      %v529 = vpop.permute.xlu0 %528
      %531 = vset.pattern.permute.xlu0 2
      %532 = vperm.xlu0 %531, %v320
      %v533 = vpop.permute.xlu0 %532
      %535 = vset.pattern.permute.xlu0 2
      %536 = vperm.xlu0 %535, %v321
      %v537 = vpop.permute.xlu0 %536
      %539 = vset.pattern.permute.xlu0 2
      %540 = vperm.xlu0 %539, %v322
      %v541 = vpop.permute.xlu0 %540
      %543 = vset.pattern.permute.xlu0 2
      %544 = vperm.xlu0 %543, %v323
      %v545 = vpop.permute.xlu0 %544
      %547 = vset.pattern.permute.xlu0 2
      %548 = vperm.xlu0 %547, %v324
      %v549 = vpop.permute.xlu0 %548
      %551 = vset.pattern.permute.xlu0 2
      %552 = vperm.xlu0 %551, %v325
      %v553 = vpop.permute.xlu0 %552
      %v555 = vperm.slane %v317, 2
      %v556 = vperm.slane %v317, 6
      %v559 = vperm.slane %v555, 2
      %v560 = vperm.slane %v556, 2
      %v561 = vmul.f32 %v525, %v559
      %v562 = vmul.f32 %v525, %v560
      %v563 = vmul.f32 %v529, %v559
      %v564 = vmul.f32 %v529, %v560
      %v565 = vmul.f32 %v533, %v559
      %v566 = vmul.f32 %v533, %v560
      %v567 = vmul.f32 %v537, %v559
      %v568 = vmul.f32 %v537, %v560
      %v569 = vmul.f32 %v541, %v559
      %v570 = vmul.f32 %v541, %v560
      %v571 = vmul.f32 %v545, %v559
      %v572 = vmul.f32 %v545, %v560
      %v573 = vmul.f32 %v549, %v559
      %v574 = vmul.f32 %v549, %v560
      %v575 = vmul.f32 %v553, %v559
      %v576 = vmul.f32 %v553, %v560
      %v577 = vadd.f32 %v507, %v561
      %v578 = vadd.f32 %v508, %v562
      %v579 = vadd.f32 %v509, %v563
      %v580 = vadd.f32 %v510, %v564
      %v581 = vadd.f32 %v511, %v565
      %v582 = vadd.f32 %v512, %v566
      %v583 = vadd.f32 %v513, %v567
      %v584 = vadd.f32 %v514, %v568
      %v585 = vadd.f32 %v515, %v569
      %v586 = vadd.f32 %v516, %v570
      %v587 = vadd.f32 %v517, %v571
      %v588 = vadd.f32 %v518, %v572
      %v589 = vadd.f32 %v519, %v573
      %v590 = vadd.f32 %v520, %v574
      %v591 = vadd.f32 %v521, %v575
      %v592 = vadd.f32 %v522, %v576
      %593 = vset.pattern.permute.xlu0 3
      %594 = vperm.xlu0 %593, %v318
      %v595 = vpop.permute.xlu0 %594
      %597 = vset.pattern.permute.xlu0 3
      %598 = vperm.xlu0 %597, %v319
      %v599 = vpop.permute.xlu0 %598
      %601 = vset.pattern.permute.xlu0 3
      %602 = vperm.xlu0 %601, %v320
      %v603 = vpop.permute.xlu0 %602
      %605 = vset.pattern.permute.xlu0 3
      %606 = vperm.xlu0 %605, %v321
      %v607 = vpop.permute.xlu0 %606
      %609 = vset.pattern.permute.xlu0 3
      %610 = vperm.xlu0 %609, %v322
      %v611 = vpop.permute.xlu0 %610
      %613 = vset.pattern.permute.xlu0 3
      %614 = vperm.xlu0 %613, %v323
      %v615 = vpop.permute.xlu0 %614
      %617 = vset.pattern.permute.xlu0 3
      %618 = vperm.xlu0 %617, %v324
      %v619 = vpop.permute.xlu0 %618
      %621 = vset.pattern.permute.xlu0 3
      %622 = vperm.xlu0 %621, %v325
      %v623 = vpop.permute.xlu0 %622
      %v625 = vperm.slane %v317, 3
      %v626 = vperm.slane %v317, 7
      %v629 = vperm.slane %v625, 3
      %v630 = vperm.slane %v626, 3
      %v631 = vmul.f32 %v595, %v629
      %v632 = vmul.f32 %v595, %v630
      %v633 = vmul.f32 %v599, %v629
      %v634 = vmul.f32 %v599, %v630
      %v635 = vmul.f32 %v603, %v629
      %v636 = vmul.f32 %v603, %v630
      %v637 = vmul.f32 %v607, %v629
      %v638 = vmul.f32 %v607, %v630
      %v639 = vmul.f32 %v611, %v629
      %v640 = vmul.f32 %v611, %v630
      %v641 = vmul.f32 %v615, %v629
      %v642 = vmul.f32 %v615, %v630
      %v643 = vmul.f32 %v619, %v629
      %v644 = vmul.f32 %v619, %v630
      %v645 = vmul.f32 %v623, %v629
      %v646 = vmul.f32 %v623, %v630
      %v647 = vadd.f32 %v577, %v631
      %v648 = vadd.f32 %v578, %v632
      %v649 = vadd.f32 %v579, %v633
      %v650 = vadd.f32 %v580, %v634
      %v651 = vadd.f32 %v581, %v635
      %v652 = vadd.f32 %v582, %v636
      %v653 = vadd.f32 %v583, %v637
      %v654 = vadd.f32 %v584, %v638
      %v655 = vadd.f32 %v585, %v639
      %v656 = vadd.f32 %v586, %v640
      %v657 = vadd.f32 %v587, %v641
      %v658 = vadd.f32 %v588, %v642
      %v659 = vadd.f32 %v589, %v643
      %v660 = vadd.f32 %v590, %v644
      %v661 = vadd.f32 %v591, %v645
      %v662 = vadd.f32 %v592, %v646
      %vm663 = vcmp.ge.f32.partialorder %v647, 0.0
      %vm664 = vcmp.ge.f32.partialorder %v648, 0.0
      %vm665 = vcmp.ge.f32.partialorder %v649, 0.0
      %vm666 = vcmp.ge.f32.partialorder %v650, 0.0
      %vm667 = vcmp.ge.f32.partialorder %v651, 0.0
      %vm668 = vcmp.ge.f32.partialorder %v652, 0.0
      %vm669 = vcmp.ge.f32.partialorder %v653, 0.0
      %vm670 = vcmp.ge.f32.partialorder %v654, 0.0
      %vm671 = vcmp.ge.f32.partialorder %v655, 0.0
      %vm672 = vcmp.ge.f32.partialorder %v656, 0.0
      %vm673 = vcmp.ge.f32.partialorder %v657, 0.0
      %vm674 = vcmp.ge.f32.partialorder %v658, 0.0
      %vm675 = vcmp.ge.f32.partialorder %v659, 0.0
      %vm676 = vcmp.ge.f32.partialorder %v660, 0.0
      %vm677 = vcmp.ge.f32.partialorder %v661, 0.0
      %vm678 = vcmp.ge.f32.partialorder %v662, 0.0
      %v679 = vmul.f32 %v647, 0.2
      %v680 = vmul.f32 %v648, 0.2
      %v681 = vmul.f32 %v649, 0.2
      %v682 = vmul.f32 %v650, 0.2
      %v683 = vmul.f32 %v651, 0.2
      %v684 = vmul.f32 %v652, 0.2
      %v685 = vmul.f32 %v653, 0.2
      %v686 = vmul.f32 %v654, 0.2
      %v687 = vmul.f32 %v655, 0.2
      %v688 = vmul.f32 %v656, 0.2
      %v689 = vmul.f32 %v657, 0.2
      %v690 = vmul.f32 %v658, 0.2
      %v691 = vmul.f32 %v659, 0.2
      %v692 = vmul.f32 %v660, 0.2
      %v693 = vmul.f32 %v661, 0.2
      %v694 = vmul.f32 %v662, 0.2
      %v695 = vsel %vm663, %v647, %v679
      %v696 = vsel %vm664, %v648, %v680
      %v697 = vsel %vm665, %v649, %v681
      %v698 = vsel %vm666, %v650, %v682
      %v699 = vsel %vm667, %v651, %v683
      %v700 = vsel %vm668, %v652, %v684
      %v701 = vsel %vm669, %v653, %v685
      %v702 = vsel %vm670, %v654, %v686
      %v703 = vsel %vm671, %v655, %v687
      %v704 = vsel %vm672, %v656, %v688
      %v705 = vsel %vm673, %v657, %v689
      %v706 = vsel %vm674, %v658, %v690
      %v707 = vsel %vm675, %v659, %v691
      %v708 = vsel %vm676, %v660, %v692
      %v709 = vsel %vm677, %v661, %v693
      %v710 = vsel %vm678, %v662, %v694
      %v711 = vld [vmem:[%s3] sm:$0xf]
      %v712 = vld [vmem:[%s3 + $0x4] sm:$0xf]
      %v713 = vld [vmem:[%s3 + $0x8] sm:$0xf]
      %v714 = vld [vmem:[%s3 + $0xc] sm:$0xf]
      %v715 = vld [vmem:[%s3 + $0x10] sm:$0xf]
      %v716 = vld [vmem:[%s3 + $0x14] sm:$0xf]
      %v717 = vld [vmem:[%s3 + $0x18] sm:$0xf]
      %v718 = vld [vmem:[%s3 + $0x1c] sm:$0xf]
      %v719 = vld [vmem:[%s3 + $0x20] sm:$0xf]
      %v720 = vld [vmem:[%s3 + $0x24] sm:$0xf]
      %v721 = vld [vmem:[%s3 + $0x28] sm:$0xf]
      %v722 = vld [vmem:[%s3 + $0x2c] sm:$0xf]
      %v723 = vld [vmem:[%s3 + $0x30] sm:$0xf]
      %v724 = vld [vmem:[%s3 + $0x34] sm:$0xf]
      %v725 = vld [vmem:[%s3 + $0x38] sm:$0xf]
      %v726 = vld [vmem:[%s3 + $0x3c] sm:$0xf]
      %v727 = vpack.c.bf16 %v697, %v695
      %v728 = vpack.c.bf16 %v698, %v696
      %v729 = vpack.c.bf16 %v701, %v699
      %v730 = vpack.c.bf16 %v702, %v700
      %v731 = vpack.c.bf16 %v705, %v703
      %v732 = vpack.c.bf16 %v706, %v704
      %v733 = vpack.c.bf16 %v709, %v707
      %v734 = vpack.c.bf16 %v710, %v708
      %v751 = vunpack.c.l.b16 %v711
      %v752 = vunpack.c.l.b16 %v712
      %v753 = vunpack.c.l.b16 %v713
      %v754 = vunpack.c.l.b16 %v714
      %v755 = vunpack.c.l.b16 %v715
      %v756 = vunpack.c.l.b16 %v716
      %v757 = vunpack.c.l.b16 %v717
      %v758 = vunpack.c.l.b16 %v718
      %v759 = vunpack.c.l.b16 %v719
      %v760 = vunpack.c.l.b16 %v720
      %v761 = vunpack.c.l.b16 %v721
      %v762 = vunpack.c.l.b16 %v722
      %v763 = vunpack.c.l.b16 %v723
      %v764 = vunpack.c.l.b16 %v724
      %v765 = vunpack.c.l.b16 %v725
      %v766 = vunpack.c.l.b16 %v726
      %v767 = vpack.c.b16 %v752, %v751
      %v768 = vpack.c.b16 %v754, %v753
      %v769 = vpack.c.b16 %v756, %v755
      %v770 = vpack.c.b16 %v758, %v757
      %v771 = vpack.c.b16 %v760, %v759
      %v772 = vpack.c.b16 %v762, %v761
      %v773 = vpack.c.b16 %v764, %v763
      %v774 = vpack.c.b16 %v766, %v765
      %vm775 = vcmask 523264
      %v777 = vsel %vm775, %v767, 0
      %v780 = vsel %vm775, %v768, 0
      %v783 = vsel %vm775, %v769, 0
      %v786 = vsel %vm775, %v770, 0
      %v789 = vsel %vm775, %v771, 0
      %v792 = vsel %vm775, %v772, 0
      %v795 = vsel %vm775, %v773, 0
      %v798 = vsel %vm775, %v774, 0
      %800 = vmatpush.bf16.msra.mxu0 0
      %801 = vmatpush.bf16.msra.mxu0 0
      %802 = vmatpush.bf16.msra.mxu0 0
      %803 = vmatpush.bf16.msra.mxu0 0
      %804 = vmatpush.bf16.msra.mxu0 %v733
      %805 = vmatpush.bf16.msra.mxu0 %v731
      %806 = vmatpush.bf16.msra.mxu0 %v729
      %807 = vmatpush.bf16.msra.mxu0 %v727
      %808 = vmatmul.bf16.gmra.mxu0 %v777
      %v809 = vpop.f32.mrf.mxu0
      %v810 = vadd.f32 0.0, %v809
      %v811 = vpop.f32.mrf.mxu0
      %v812 = vadd.f32 0.0, %v811
      %813 = vmatmul.bf16.gmra.mxu0 %v780
      %v814 = vpop.f32.mrf.mxu0
      %v815 = vadd.f32 0.0, %v814
      %v816 = vpop.f32.mrf.mxu0
      %v817 = vadd.f32 0.0, %v816
      %818 = vmatmul.bf16.gmra.mxu0 %v783
      %v819 = vpop.f32.mrf.mxu0
      %v820 = vadd.f32 0.0, %v819
      %v821 = vpop.f32.mrf.mxu0
      %v822 = vadd.f32 0.0, %v821
      %823 = vmatmul.bf16.gmra.mxu0 %v786
      %v824 = vpop.f32.mrf.mxu0
      %v825 = vadd.f32 0.0, %v824
      %v826 = vpop.f32.mrf.mxu0
      %v827 = vadd.f32 0.0, %v826
      %828 = vmatmul.bf16.gmra.mxu0 %v789
      %v829 = vpop.f32.mrf.mxu0
      %v830 = vadd.f32 0.0, %v829
      %v831 = vpop.f32.mrf.mxu0
      %v832 = vadd.f32 0.0, %v831
      %833 = vmatmul.bf16.gmra.mxu0 %v792
      %v834 = vpop.f32.mrf.mxu0
      %v835 = vadd.f32 0.0, %v834
      %v836 = vpop.f32.mrf.mxu0
      %v837 = vadd.f32 0.0, %v836
      %838 = vmatmul.bf16.gmra.mxu0 %v795
      %v839 = vpop.f32.mrf.mxu0
      %v840 = vadd.f32 0.0, %v839
      %v841 = vpop.f32.mrf.mxu0
      %v842 = vadd.f32 0.0, %v841
      %843 = vmatmul.bf16.gmra.mxu0 %v798
      %v844 = vpop.f32.mrf.mxu0
      %v845 = vadd.f32 0.0, %v844
      %v846 = vpop.f32.mrf.mxu0
      %v847 = vadd.f32 0.0, %v846
      %848 = vdwg.mxu0
      %849 = vmatpush.bf16.msra.mxu0 0
      %850 = vmatpush.bf16.msra.mxu0 0
      %851 = vmatpush.bf16.msra.mxu0 0
      %852 = vmatpush.bf16.msra.mxu0 0
      %853 = vmatpush.bf16.msra.mxu0 %v734
      %854 = vmatpush.bf16.msra.mxu0 %v732
      %855 = vmatpush.bf16.msra.mxu0 %v730
      %856 = vmatpush.bf16.msra.mxu0 %v728
      %857 = vmatmul.bf16.gmra.mxu0 %v777
      %v858 = vpop.f32.mrf.mxu0
      %v859 = vadd.f32 0.0, %v858
      %v860 = vpop.f32.mrf.mxu0
      %v861 = vadd.f32 0.0, %v860
      %862 = vmatmul.bf16.gmra.mxu0 %v780
      %v863 = vpop.f32.mrf.mxu0
      %v864 = vadd.f32 0.0, %v863
      %v865 = vpop.f32.mrf.mxu0
      %v866 = vadd.f32 0.0, %v865
      %867 = vmatmul.bf16.gmra.mxu0 %v783
      %v868 = vpop.f32.mrf.mxu0
      %v869 = vadd.f32 0.0, %v868
      %v870 = vpop.f32.mrf.mxu0
      %v871 = vadd.f32 0.0, %v870
      %872 = vmatmul.bf16.gmra.mxu0 %v786
      %v873 = vpop.f32.mrf.mxu0
      %v874 = vadd.f32 0.0, %v873
      %v875 = vpop.f32.mrf.mxu0
      %v876 = vadd.f32 0.0, %v875
      %877 = vmatmul.bf16.gmra.mxu0 %v789
      %v878 = vpop.f32.mrf.mxu0
      %v879 = vadd.f32 0.0, %v878
      %v880 = vpop.f32.mrf.mxu0
      %v881 = vadd.f32 0.0, %v880
      %882 = vmatmul.bf16.gmra.mxu0 %v792
      %v883 = vpop.f32.mrf.mxu0
      %v884 = vadd.f32 0.0, %v883
      %v885 = vpop.f32.mrf.mxu0
      %v886 = vadd.f32 0.0, %v885
      %887 = vmatmul.bf16.gmra.mxu0 %v795
      %v888 = vpop.f32.mrf.mxu0
      %v889 = vadd.f32 0.0, %v888
      %v890 = vpop.f32.mrf.mxu0
      %v891 = vadd.f32 0.0, %v890
      %892 = vmatmul.bf16.gmra.mxu0 %v798
      %v893 = vpop.f32.mrf.mxu0
      %v894 = vadd.f32 0.0, %v893
      %v895 = vpop.f32.mrf.mxu0
      %v896 = vadd.f32 0.0, %v895
      %897 = vdwg.mxu0
      %v898 = vld [vmem:[%s4] sm:$0xff]
      %v899 = vld [vmem:[%s4 + $0x8] sm:$0xff]
      %v900 = vld [vmem:[%s4 + $0x10] sm:$0xff]
      %v901 = vld [vmem:[%s4 + $0x18] sm:$0xff]
      %v902 = vld [vmem:[%s4 + $0x20] sm:$0xff]
      %v903 = vld [vmem:[%s4 + $0x28] sm:$0xff]
      %v904 = vld [vmem:[%s4 + $0x30] sm:$0xff]
      %v905 = vld [vmem:[%s4 + $0x38] sm:$0xff]
      %v906 = vld [vmem:[%s4 + $0x40] sm:$0xff]
      %v907 = vld [vmem:[%s4 + $0x48] sm:$0xff]
      %v908 = vld [vmem:[%s4 + $0x50] sm:$0xff]
      %v909 = vld [vmem:[%s4 + $0x58] sm:$0xff]
      %v910 = vld [vmem:[%s4 + $0x60] sm:$0xff]
      %v911 = vld [vmem:[%s4 + $0x68] sm:$0xff]
      %v912 = vld [vmem:[%s4 + $0x70] sm:$0xff]
      %v913 = vld [vmem:[%s4 + $0x78] sm:$0xff]
      %915 = vset.pattern.permute.xlu0 0
      %916 = vperm.xlu0 %915, %v898
      %v917 = vpop.permute.xlu0 %916
      %920 = vset.pattern.permute.xlu0 0
      %921 = vperm.xlu0 %920, %v899
      %v922 = vpop.permute.xlu0 %921
      %925 = vset.pattern.permute.xlu0 0
      %926 = vperm.xlu0 %925, %v900
      %v927 = vpop.permute.xlu0 %926
      %930 = vset.pattern.permute.xlu0 0
      %931 = vperm.xlu0 %930, %v901
      %v932 = vpop.permute.xlu0 %931
      %935 = vset.pattern.permute.xlu0 0
      %936 = vperm.xlu0 %935, %v902
      %v937 = vpop.permute.xlu0 %936
      %940 = vset.pattern.permute.xlu0 0
      %941 = vperm.xlu0 %940, %v903
      %v942 = vpop.permute.xlu0 %941
      %945 = vset.pattern.permute.xlu0 0
      %946 = vperm.xlu0 %945, %v904
      %v947 = vpop.permute.xlu0 %946
      %950 = vset.pattern.permute.xlu0 0
      %951 = vperm.xlu0 %950, %v905
      %v952 = vpop.permute.xlu0 %951
      %955 = vset.pattern.permute.xlu0 0
      %956 = vperm.xlu0 %955, %v906
      %v957 = vpop.permute.xlu0 %956
      %960 = vset.pattern.permute.xlu0 0
      %961 = vperm.xlu0 %960, %v907
      %v962 = vpop.permute.xlu0 %961
      %965 = vset.pattern.permute.xlu0 0
      %966 = vperm.xlu0 %965, %v908
      %v967 = vpop.permute.xlu0 %966
      %970 = vset.pattern.permute.xlu0 0
      %971 = vperm.xlu0 %970, %v909
      %v972 = vpop.permute.xlu0 %971
      %975 = vset.pattern.permute.xlu0 0
      %976 = vperm.xlu0 %975, %v910
      %v977 = vpop.permute.xlu0 %976
      %980 = vset.pattern.permute.xlu0 0
      %981 = vperm.xlu0 %980, %v911
      %v982 = vpop.permute.xlu0 %981
      %985 = vset.pattern.permute.xlu0 0
      %986 = vperm.xlu0 %985, %v912
      %v987 = vpop.permute.xlu0 %986
      %990 = vset.pattern.permute.xlu0 0
      %991 = vperm.xlu0 %990, %v913
      %v992 = vpop.permute.xlu0 %991
      %v994 = vmul.f32 %v810, %v917
      %v995 = vmul.f32 %v859, %v917
      %v996 = vmul.f32 %v812, %v922
      %v997 = vmul.f32 %v861, %v922
      %v998 = vmul.f32 %v815, %v927
      %v999 = vmul.f32 %v864, %v927
      %v1000 = vmul.f32 %v817, %v932
      %v1001 = vmul.f32 %v866, %v932
      %v1002 = vmul.f32 %v820, %v937
      %v1003 = vmul.f32 %v869, %v937
      %v1004 = vmul.f32 %v822, %v942
      %v1005 = vmul.f32 %v871, %v942
      %v1006 = vmul.f32 %v825, %v947
      %v1007 = vmul.f32 %v874, %v947
      %v1008 = vmul.f32 %v827, %v952
      %v1009 = vmul.f32 %v876, %v952
      %v1010 = vmul.f32 %v830, %v957
      %v1011 = vmul.f32 %v879, %v957
      %v1012 = vmul.f32 %v832, %v962
      %v1013 = vmul.f32 %v881, %v962
      %v1014 = vmul.f32 %v835, %v967
      %v1015 = vmul.f32 %v884, %v967
      %v1016 = vmul.f32 %v837, %v972
      %v1017 = vmul.f32 %v886, %v972
      %v1018 = vmul.f32 %v840, %v977
      %v1019 = vmul.f32 %v889, %v977
      %v1020 = vmul.f32 %v842, %v982
      %v1021 = vmul.f32 %v891, %v982
      %v1022 = vmul.f32 %v845, %v987
      %v1023 = vmul.f32 %v894, %v987
      %v1024 = vmul.f32 %v847, %v992
      %v1025 = vmul.f32 %v896, %v992
      %v1026 = vld [vmem:[%s5] sm:$0xff]
      %v1027 = vld [vmem:[%s5 + $0x8] sm:$0xff]
      %v1028 = vld [vmem:[%s5 + $0x10] sm:$0xff]
      %v1029 = vld [vmem:[%s5 + $0x18] sm:$0xff]
      %v1030 = vld [vmem:[%s5 + $0x20] sm:$0xff]
      %v1031 = vld [vmem:[%s5 + $0x28] sm:$0xff]
      %v1032 = vld [vmem:[%s5 + $0x30] sm:$0xff]
      %v1033 = vld [vmem:[%s5 + $0x38] sm:$0xff]
      %v1034 = vld [vmem:[%s5 + $0x40] sm:$0xff]
      %v1035 = vld [vmem:[%s5 + $0x48] sm:$0xff]
      %v1036 = vld [vmem:[%s5 + $0x50] sm:$0xff]
      %v1037 = vld [vmem:[%s5 + $0x58] sm:$0xff]
      %v1038 = vld [vmem:[%s5 + $0x60] sm:$0xff]
      %v1039 = vld [vmem:[%s5 + $0x68] sm:$0xff]
      %v1040 = vld [vmem:[%s5 + $0x70] sm:$0xff]
      %v1041 = vld [vmem:[%s5 + $0x78] sm:$0xff]
      %1043 = vset.pattern.permute.xlu0 0
      %1044 = vperm.xlu0 %1043, %v1026
      %v1045 = vpop.permute.xlu0 %1044
      %1048 = vset.pattern.permute.xlu0 0
      %1049 = vperm.xlu0 %1048, %v1027
      %v1050 = vpop.permute.xlu0 %1049
      %1053 = vset.pattern.permute.xlu0 0
      %1054 = vperm.xlu0 %1053, %v1028
      %v1055 = vpop.permute.xlu0 %1054
      %1058 = vset.pattern.permute.xlu0 0
      %1059 = vperm.xlu0 %1058, %v1029
      %v1060 = vpop.permute.xlu0 %1059
      %1063 = vset.pattern.permute.xlu0 0
      %1064 = vperm.xlu0 %1063, %v1030
      %v1065 = vpop.permute.xlu0 %1064
      %1068 = vset.pattern.permute.xlu0 0
      %1069 = vperm.xlu0 %1068, %v1031
      %v1070 = vpop.permute.xlu0 %1069
      %1073 = vset.pattern.permute.xlu0 0
      %1074 = vperm.xlu0 %1073, %v1032
      %v1075 = vpop.permute.xlu0 %1074
      %1078 = vset.pattern.permute.xlu0 0
      %1079 = vperm.xlu0 %1078, %v1033
      %v1080 = vpop.permute.xlu0 %1079
      %1083 = vset.pattern.permute.xlu0 0
      %1084 = vperm.xlu0 %1083, %v1034
      %v1085 = vpop.permute.xlu0 %1084
      %1088 = vset.pattern.permute.xlu0 0
      %1089 = vperm.xlu0 %1088, %v1035
      %v1090 = vpop.permute.xlu0 %1089
      %1093 = vset.pattern.permute.xlu0 0
      %1094 = vperm.xlu0 %1093, %v1036
      %v1095 = vpop.permute.xlu0 %1094
      %1098 = vset.pattern.permute.xlu0 0
      %1099 = vperm.xlu0 %1098, %v1037
      %v1100 = vpop.permute.xlu0 %1099
      %1103 = vset.pattern.permute.xlu0 0
      %1104 = vperm.xlu0 %1103, %v1038
      %v1105 = vpop.permute.xlu0 %1104
      %1108 = vset.pattern.permute.xlu0 0
      %1109 = vperm.xlu0 %1108, %v1039
      %v1110 = vpop.permute.xlu0 %1109
      %1113 = vset.pattern.permute.xlu0 0
      %1114 = vperm.xlu0 %1113, %v1040
      %v1115 = vpop.permute.xlu0 %1114
      %1118 = vset.pattern.permute.xlu0 0
      %1119 = vperm.xlu0 %1118, %v1041
      %v1120 = vpop.permute.xlu0 %1119
      %v1122 = vadd.f32 %v994, %v1045
      %v1123 = vadd.f32 %v995, %v1045
      %v1124 = vadd.f32 %v996, %v1050
      %v1125 = vadd.f32 %v997, %v1050
      %v1126 = vadd.f32 %v998, %v1055
      %v1127 = vadd.f32 %v999, %v1055
      %v1128 = vadd.f32 %v1000, %v1060
      %v1129 = vadd.f32 %v1001, %v1060
      %v1130 = vadd.f32 %v1002, %v1065
      %v1131 = vadd.f32 %v1003, %v1065
      %v1132 = vadd.f32 %v1004, %v1070
      %v1133 = vadd.f32 %v1005, %v1070
      %v1134 = vadd.f32 %v1006, %v1075
      %v1135 = vadd.f32 %v1007, %v1075
      %v1136 = vadd.f32 %v1008, %v1080
      %v1137 = vadd.f32 %v1009, %v1080
      %v1138 = vadd.f32 %v1010, %v1085
      %v1139 = vadd.f32 %v1011, %v1085
      %v1140 = vadd.f32 %v1012, %v1090
      %v1141 = vadd.f32 %v1013, %v1090
      %v1142 = vadd.f32 %v1014, %v1095
      %v1143 = vadd.f32 %v1015, %v1095
      %v1144 = vadd.f32 %v1016, %v1100
      %v1145 = vadd.f32 %v1017, %v1100
      %v1146 = vadd.f32 %v1018, %v1105
      %v1147 = vadd.f32 %v1019, %v1105
      %v1148 = vadd.f32 %v1020, %v1110
      %v1149 = vadd.f32 %v1021, %v1110
      %v1150 = vadd.f32 %v1022, %v1115
      %v1151 = vadd.f32 %v1023, %v1115
      %v1152 = vadd.f32 %v1024, %v1120
      %v1153 = vadd.f32 %v1025, %v1120
      %vm1154 = vcmp.ge.f32.partialorder %v1122, 0.0
      %vm1155 = vcmp.ge.f32.partialorder %v1123, 0.0
      %vm1156 = vcmp.ge.f32.partialorder %v1124, 0.0
      %vm1157 = vcmp.ge.f32.partialorder %v1125, 0.0
      %vm1158 = vcmp.ge.f32.partialorder %v1126, 0.0
      %vm1159 = vcmp.ge.f32.partialorder %v1127, 0.0
      %vm1160 = vcmp.ge.f32.partialorder %v1128, 0.0
      %vm1161 = vcmp.ge.f32.partialorder %v1129, 0.0
      %vm1162 = vcmp.ge.f32.partialorder %v1130, 0.0
      %vm1163 = vcmp.ge.f32.partialorder %v1131, 0.0
      %vm1164 = vcmp.ge.f32.partialorder %v1132, 0.0
      %vm1165 = vcmp.ge.f32.partialorder %v1133, 0.0
      %vm1166 = vcmp.ge.f32.partialorder %v1134, 0.0
      %vm1167 = vcmp.ge.f32.partialorder %v1135, 0.0
      %vm1168 = vcmp.ge.f32.partialorder %v1136, 0.0
      %vm1169 = vcmp.ge.f32.partialorder %v1137, 0.0
      %vm1170 = vcmp.ge.f32.partialorder %v1138, 0.0
      %vm1171 = vcmp.ge.f32.partialorder %v1139, 0.0
      %vm1172 = vcmp.ge.f32.partialorder %v1140, 0.0
      %vm1173 = vcmp.ge.f32.partialorder %v1141, 0.0
      %vm1174 = vcmp.ge.f32.partialorder %v1142, 0.0
      %vm1175 = vcmp.ge.f32.partialorder %v1143, 0.0
      %vm1176 = vcmp.ge.f32.partialorder %v1144, 0.0
      %vm1177 = vcmp.ge.f32.partialorder %v1145, 0.0
      %vm1178 = vcmp.ge.f32.partialorder %v1146, 0.0
      %vm1179 = vcmp.ge.f32.partialorder %v1147, 0.0
      %vm1180 = vcmp.ge.f32.partialorder %v1148, 0.0
      %vm1181 = vcmp.ge.f32.partialorder %v1149, 0.0
      %vm1182 = vcmp.ge.f32.partialorder %v1150, 0.0
      %vm1183 = vcmp.ge.f32.partialorder %v1151, 0.0
      %vm1184 = vcmp.ge.f32.partialorder %v1152, 0.0
      %vm1185 = vcmp.ge.f32.partialorder %v1153, 0.0
      %v1186 = vmul.f32 %v1122, 0.2
      %v1187 = vmul.f32 %v1123, 0.2
      %v1188 = vmul.f32 %v1124, 0.2
      %v1189 = vmul.f32 %v1125, 0.2
      %v1190 = vmul.f32 %v1126, 0.2
      %v1191 = vmul.f32 %v1127, 0.2
      %v1192 = vmul.f32 %v1128, 0.2
      %v1193 = vmul.f32 %v1129, 0.2
      %v1194 = vmul.f32 %v1130, 0.2
      %v1195 = vmul.f32 %v1131, 0.2
      %v1196 = vmul.f32 %v1132, 0.2
      %v1197 = vmul.f32 %v1133, 0.2
      %v1198 = vmul.f32 %v1134, 0.2
      %v1199 = vmul.f32 %v1135, 0.2
      %v1200 = vmul.f32 %v1136, 0.2
      %v1201 = vmul.f32 %v1137, 0.2
      %v1202 = vmul.f32 %v1138, 0.2
      %v1203 = vmul.f32 %v1139, 0.2
      %v1204 = vmul.f32 %v1140, 0.2
      %v1205 = vmul.f32 %v1141, 0.2
      %v1206 = vmul.f32 %v1142, 0.2
      %v1207 = vmul.f32 %v1143, 0.2
      %v1208 = vmul.f32 %v1144, 0.2
      %v1209 = vmul.f32 %v1145, 0.2
      %v1210 = vmul.f32 %v1146, 0.2
      %v1211 = vmul.f32 %v1147, 0.2
      %v1212 = vmul.f32 %v1148, 0.2
      %v1213 = vmul.f32 %v1149, 0.2
      %v1214 = vmul.f32 %v1150, 0.2
      %v1215 = vmul.f32 %v1151, 0.2
      %v1216 = vmul.f32 %v1152, 0.2
      %v1217 = vmul.f32 %v1153, 0.2
      %v1218 = vsel %vm1154, %v1122, %v1186
      %v1219 = vsel %vm1155, %v1123, %v1187
      %v1220 = vsel %vm1156, %v1124, %v1188
      %v1221 = vsel %vm1157, %v1125, %v1189
      %v1222 = vsel %vm1158, %v1126, %v1190
      %v1223 = vsel %vm1159, %v1127, %v1191
      %v1224 = vsel %vm1160, %v1128, %v1192
      %v1225 = vsel %vm1161, %v1129, %v1193
      %v1226 = vsel %vm1162, %v1130, %v1194
      %v1227 = vsel %vm1163, %v1131, %v1195
      %v1228 = vsel %vm1164, %v1132, %v1196
      %v1229 = vsel %vm1165, %v1133, %v1197
      %v1230 = vsel %vm1166, %v1134, %v1198
      %v1231 = vsel %vm1167, %v1135, %v1199
      %v1232 = vsel %vm1168, %v1136, %v1200
      %v1233 = vsel %vm1169, %v1137, %v1201
      %v1234 = vsel %vm1170, %v1138, %v1202
      %v1235 = vsel %vm1171, %v1139, %v1203
      %v1236 = vsel %vm1172, %v1140, %v1204
      %v1237 = vsel %vm1173, %v1141, %v1205
      %v1238 = vsel %vm1174, %v1142, %v1206
      %v1239 = vsel %vm1175, %v1143, %v1207
      %v1240 = vsel %vm1176, %v1144, %v1208
      %v1241 = vsel %vm1177, %v1145, %v1209
      %v1242 = vsel %vm1178, %v1146, %v1210
      %v1243 = vsel %vm1179, %v1147, %v1211
      %v1244 = vsel %vm1180, %v1148, %v1212
      %v1245 = vsel %vm1181, %v1149, %v1213
      %v1246 = vsel %vm1182, %v1150, %v1214
      %v1247 = vsel %vm1183, %v1151, %v1215
      %v1248 = vsel %vm1184, %v1152, %v1216
      %v1249 = vsel %vm1185, %v1153, %v1217
      %v1250 = vld [vmem:[%s6] sm:$0xf]
      %v1251 = vpack.c.bf16 %v1220, %v1218
      %v1252 = vpack.c.bf16 %v1221, %v1219
      %v1253 = vpack.c.bf16 %v1224, %v1222
      %v1254 = vpack.c.bf16 %v1225, %v1223
      %v1255 = vpack.c.bf16 %v1228, %v1226
      %v1256 = vpack.c.bf16 %v1229, %v1227
      %v1257 = vpack.c.bf16 %v1232, %v1230
      %v1258 = vpack.c.bf16 %v1233, %v1231
      %v1259 = vpack.c.bf16 %v1236, %v1234
      %v1260 = vpack.c.bf16 %v1237, %v1235
      %v1261 = vpack.c.bf16 %v1240, %v1238
      %v1262 = vpack.c.bf16 %v1241, %v1239
      %v1263 = vpack.c.bf16 %v1244, %v1242
      %v1264 = vpack.c.bf16 %v1245, %v1243
      %v1265 = vpack.c.bf16 %v1248, %v1246
      %v1266 = vpack.c.bf16 %v1249, %v1247
      %1267 = vmatpush.bf16.msra.mxu0 %v1265
      %1268 = vmatpush.bf16.msra.mxu0 %v1263
      %1269 = vmatpush.bf16.msra.mxu0 %v1261
      %1270 = vmatpush.bf16.msra.mxu0 %v1259
      %1271 = vmatpush.bf16.msra.mxu0 %v1257
      %1272 = vmatpush.bf16.msra.mxu0 %v1255
      %1273 = vmatpush.bf16.msra.mxu0 %v1253
      %1274 = vmatpush.bf16.msra.mxu0 %v1251
      %1275 = vmatmul.bf16.gmra.mxu0 %v1250
      %v1276 = vpop.f32.mrf.mxu0
      %v1277 = vadd.f32 0.0, %v1276
      %v1278 = vpop.f32.mrf.mxu0
      %1279 = vdwg.mxu0
      %1280 = vmatpush.bf16.msra.mxu0 %v1266
      %1281 = vmatpush.bf16.msra.mxu0 %v1264
      %1282 = vmatpush.bf16.msra.mxu0 %v1262
      %1283 = vmatpush.bf16.msra.mxu0 %v1260
      %1284 = vmatpush.bf16.msra.mxu0 %v1258
      %1285 = vmatpush.bf16.msra.mxu0 %v1256
      %1286 = vmatpush.bf16.msra.mxu0 %v1254
      %1287 = vmatpush.bf16.msra.mxu0 %v1252
      %1288 = vmatmul.bf16.gmra.mxu0 %v1250
      %v1289 = vpop.f32.mrf.mxu0
      %v1290 = vadd.f32 0.0, %v1289
      %v1291 = vpop.f32.mrf.mxu0
      %1292 = vdwg.mxu0
      %v1295 = vrot.slane %v1290, 7
      %vm1296 = vcmask 1040384
      %v1297 = vsel %vm1296, %v1277, %v1295
      %v1299 = vlaneseq
      %vm1300 = vcmp.ge.s32.totalorder %v1299, 0
      %vm1301 = vcmp.lt.s32.totalorder %v1299, 256
      %vm1302 = vmand %vm1300, %vm1301
      %1303 = vst.msk [vmem:[%s314] sm:$0x3] %vm1302, %v1297
      %s1304 = smul.u32 2, %s23
      %p1305 = scmp.lt.s32.totalorder %s22, 1
      %s1306 = scalar_select %p1305, %s22, 1
      %p1307 = scmp.lt.s32.totalorder %s1304, 1
      %s1308 = scalar_select %p1307, %s1304, 1
      %s1309 = smul.addr %s1306, 2
      %s1310 = sadd.s32 %s1308, %s1309
      %s1311 = scalar_lea.vmem %s7, %s1310
      // Predicated region
      $region49: #{pixel_discriminator_forward.3} parent=47 // pred_check
        %p1312 = pneg %p204
      $region50: #{pixel_discriminator_forward.3} parent=47 // pred_check_branch
        %1314 = sbr.rel (%p1312) target = $region52
      $region51: #{pixel_discriminator_forward.3} parent=47 // pred_region
        %s1315 = smul.u32 2, %s23
      $region52: #{pixel_discriminator_forward.3} parent=47 // pred_fallthru
        _
    $region48: #{pixel_discriminator_forward.3} parent=5 // pred_fallthru
      _
    %p1316 = scmp.le.s32.totalorder 2, %s13
    // Predicated region
    $region53: #{pixel_discriminator_forward.3} parent=5 // pred_check
      %p1317 = pneg %p1316
    $region54: #{pixel_discriminator_forward.3} parent=5 // pred_check_branch
      %1319 = sbr.rel (%p1317) target = $region56
    $region55: #{pixel_discriminator_forward.3} parent=5 // pred_region
      %s1320 = ssub.s32 %s13, 2
      // Predicated region
      $region57: #{pixel_discriminator_forward.3} parent=55 // pred_check
        %p1321 = pneg %p210
      $region58: #{pixel_discriminator_forward.3} parent=55 // pred_check_branch
        %1323 = sbr.rel (%p1321) target = $region60
      $region59: #{pixel_discriminator_forward.3} parent=55 // pred_region
        %s1324 = smul.u32 2, %s25
        %p1325 = scmp.lt.s32.totalorder %s24, 1
        %s1326 = scalar_select %p1325, %s24, 1
        %p1327 = scmp.lt.s32.totalorder %s1324, 1
        %s1328 = scalar_select %p1327, %s1324, 1
        %s1329 = smul.addr %s1326, 2
        %s1330 = sadd.s32 %s1328, %s1329
        %s1331 = scalar_lea.vmem %s7, %s1330
      $region60: #{pixel_discriminator_forward.3} parent=55 // pred_fallthru
        _
    $region56: #{pixel_discriminator_forward.3} parent=5 // pred_fallthru
      _
  $region6: #{pixel_discriminator_forward.3} parent=0 // loop_footer
    %s17 = sadd.s32 1, %s13
  $region7: #{pixel_discriminator_forward.3} parent=0 // loop_footer_branch
    %12 = sbr.rel target = $region3
  $region8: #{pixel_discriminator_forward.3} parent=0 // loop_exit
    _

</llo_original>
